<compile_context>
chip_gen: v6e
topology: v6e:2x2x1
jax: 0.10.0
libtpu: 0.0.40
codegen_flags: <defaults>
</compile_context>

<pallas_src>
import functools

import numpy as np
import jax
import jax.numpy as jnp
from jax import lax
from jax.experimental import pallas as pl
from jax.experimental.pallas import tpu as pltpu


_EPS = 1e-12


def _spectral_cls_kernel(C, Bb, n_one,
                         x_ref, dft_ref, idft_ref, triu_ref, aux_ref,
                         w_ref, b_ref, o_ref):
    """One grid step: Bb batches x C channels, rows ordered r = c*Bb + b_local.

    x_ref   : (C*Bb, T) f32   signals (lane axis = time)
    dft_ref : (T, 2T)   f32   [cos | sin] forward DFT matrix
    idft_ref: (T, 2T)   bf16  [cos | sin] inverse DFT matrix (Hilbert envelope)
    triu_ref: (T, T)    f32   upper-triangular ones (cumsum over frequency)
    aux_ref : (8, T)    f32   rows: fftfreq, hann, hilbert_filter/T, welch_scale
    w_ref   : (C, F, N) f32   projection weight, channel-major permuted
    b_ref   : (1, N)    f32   projection bias
    o_ref   : (Bb, N)   f32   logits for the Bb batches of this step
    """
    R, T = x_ref.shape
    N = w_ref.shape[2]

    x = x_ref[...]                                    # (R, T)
    freqs = aux_ref[0:1, :]                           # (1, T)
    win = aux_ref[1:2, :]                             # (1, T) periodic hann
    hilb = aux_ref[2:3, :]                            # (1, T) hilbert filter / T
    psd_scale = aux_ref[3:4, :]                       # (1, T) welch density scale

    # ---------- forward DFT: unwindowed + Welch-windowed, one stacked matmul --
    xw = win * (x - jnp.mean(x, axis=1, keepdims=True))   # constant detrend+hann
    xx = jnp.concatenate([x, xw], axis=0)                  # (2R, T)
    fwd = jnp.dot(xx, dft_ref[...], preferred_element_type=jnp.float32)  # (2R,2T)
    re = fwd[:R, :T]
    im = -fwd[:R, T:]
    re_w = fwd[R:, :T]
    im_w = fwd[R:, T:]                                      # sign irrelevant (squared)

    power = re * re + im * im
    mag = jnp.sqrt(power)                                   # |FFT|

    # 1) phase shift
    phase = jnp.arctan2(im, re)                             # (R, T)

    # 2) phase coherence = |mean_k exp(i * phase)|
    inv_mag = lax.rsqrt(power + _EPS)
    pc = jnp.sqrt(jnp.mean(re * inv_mag, axis=1, keepdims=True) ** 2 +
                  jnp.mean(im * inv_mag, axis=1, keepdims=True) ** 2)   # (R, 1)

    # 3) bispectrum == mag ; 4) bicoherence
    sum_power = jnp.sum(power, axis=1, keepdims=True)
    bico = mag * lax.rsqrt(sum_power + _EPS)                # (R, T)

    # 5) spectral centroid
    sum_mag = jnp.sum(mag, axis=1, keepdims=True)           # (R, 1)
    inv_sum_mag = pl.reciprocal(sum_mag + _EPS, approx=True)
    cent = jnp.sum(freqs * mag, axis=1, keepdims=True) * inv_sum_mag

    # cumulative sum over frequency via precomputed triangular matrix
    cs = jnp.dot(mag, triu_ref[...], preferred_element_type=jnp.float32)  # (R, T)
    iota_f = lax.broadcasted_iota(jnp.int32, (R, T), 1).astype(jnp.float32)
    big = jnp.float32(T)

    # 6) spectral roll-off: first k with cumsum >= 0.85 * total
    rolloff = jnp.min(jnp.where(cs >= 0.85 * sum_mag, iota_f, big),
                      axis=1, keepdims=True)                # (R, 1)

    # 7) spectral peak / 8) average magnitude
    peak = jnp.max(mag, axis=1, keepdims=True)
    avg = jnp.mean(mag, axis=1, keepdims=True)

    # 9) Welch PSD (single full-length segment, hann, constant detrend, density)
    psd = ((re_w * re_w + im_w * im_w) * psd_scale)[:, :n_one]   # (R, n_one)

    # 10) median frequency: freqs[first k with cumsum >= total/2]
    idx_m = jnp.min(jnp.where(cs >= 0.5 * sum_mag, iota_f, big),
                    axis=1, keepdims=True)                  # (R, 1)
    onehot = (iota_f == idx_m).astype(jnp.float32)
    medf = jnp.sum(freqs * onehot, axis=1, keepdims=True)   # (R, 1)

    # 11) amplitude modulation = std(|hilbert(x)|); bf16 stacked inverse DFT
    hh = jnp.concatenate([hilb * re, hilb * im], axis=0).astype(jnp.bfloat16)
    inv = jnp.dot(hh, idft_ref[...], preferred_element_type=jnp.float32)  # (2R,2T)
    real_a = inv[:R, :T] - inv[R:, T:]
    imag_a = inv[:R, T:] + inv[R:, :T]
    env2 = real_a * real_a + imag_a * imag_a
    env = jnp.sqrt(env2)
    var = (jnp.mean(env2, axis=1, keepdims=True) -
           jnp.mean(env, axis=1, keepdims=True) ** 2)
    am = jnp.sqrt(jnp.maximum(var, 0.0))                    # (R, 1)

    # ---------- lane-dense feature matrix, PyTorch feature order --------------
    feats = jnp.concatenate(
        [phase, pc, mag, bico, cent, rolloff, peak, avg, psd, medf, am], axis=1)

    # ---------- fused Linear projection (no HBM round-trip of features) -------
    acc = jnp.zeros((Bb, N), jnp.float32)
    for c in range(C):                          # static unroll over channels
        acc = acc + jnp.dot(feats[c * Bb:(c + 1) * Bb, :], w_ref[c],
                            preferred_element_type=jnp.float32)
    o_ref[...] = acc + b_ref[...]


def _choose_batch_block(B, C, target_rows=256):
    """Largest divisor Bb of B with Bb*C <= target_rows, preferring >= 2 grid
    steps so both TensorCores on v7x get work."""
    best_two, best_any = 0, 1
    for d in range(1, B + 1):
        if B % d == 0 and d * C <= target_rows:
            best_any = d
            if B // d >= 2:
                best_two = d
    return best_two if best_two > 0 else best_any


def spectral_classifier_forward(x_enc, sampling_rate, w_proj, b_proj,
                                batch_block=None):
    """Forward pass of the SpectralFeatures classification model.

    x_enc  : (B, T, C)
    w_proj : (F*C, num_class)  -- nn.Linear.weight.T, rows ordered f*C + c
                                  (matches the PyTorch (B,F,C) row-major flatten)
    b_proj : (1, num_class)
    returns: (B, num_class) logits
    """
    B, T, C = x_enc.shape
    n_one = T // 2 + 1
    F = 3 * T + n_one + 7
    num_class = w_proj.shape[-1]
    assert w_proj.shape[0] == F * C

    Bb = batch_block if batch_block is not None else _choose_batch_block(B, C)
    assert B % Bb == 0
    nb = B // Bb
    R = C * Bb

    # Lane-dense input layout: (nb, C*Bb, T), row r = c*Bb + b_local.
    x3 = (jnp.asarray(x_enc, jnp.float32)
          .transpose(2, 0, 1)                 # (C, B, T)
          .reshape(C, nb, Bb, T)
          .transpose(1, 0, 2, 3)              # (nb, C, Bb, T)
          .reshape(nb, R, T))

    # -------- host-precomputed constants --------------------------------------
    k = np.arange(T)
    ang = (2.0 * np.pi / T) * np.outer(k, k)
    cosm, sinm = np.cos(ang), np.sin(ang)
    dft_f32 = jnp.asarray(np.concatenate([cosm, sinm], axis=1), jnp.float32)
    idft_bf16 = jnp.asarray(np.concatenate([cosm, sinm], axis=1), jnp.bfloat16)
    triu = jnp.asarray(np.triu(np.ones((T, T))), jnp.float32)

    freqs = np.fft.fftfreq(T, 1.0 / sampling_rate)
    win = 0.5 - 0.5 * np.cos(2.0 * np.pi * np.arange(T) / T)   # periodic hann
    h = np.zeros(T)
    h[0] = 1.0
    if T % 2 == 0:
        h[T // 2] = 1.0
        h[1:T // 2] = 2.0
    else:
        h[1:(T + 1) // 2] = 2.0
    base = 1.0 / (sampling_rate * np.sum(win ** 2))
    welch_scale = np.zeros(T)
    welch_scale[:n_one] = 2.0 * base
    welch_scale[0] = base
    if T % 2 == 0:
        welch_scale[n_one - 1] = base

    aux = np.zeros((8, T), np.float32)
    aux[0] = freqs
    aux[1] = win
    aux[2] = h / T              # fold inverse-DFT 1/T into the hilbert filter
    aux[3] = welch_scale
    aux = jnp.asarray(aux)

    # Projection weight permuted so each channel owns a contiguous (F, N) slab.
    w3 = (jnp.asarray(w_proj, jnp.float32)
          .reshape(F, C, num_class)
          .transpose(1, 0, 2))               # (C, F, N)
    b2 = jnp.asarray(b_proj, jnp.float32).reshape(1, num_class)

    kernel = functools.partial(_spectral_cls_kernel, C, Bb, n_one)

    out3 = pl.pallas_call(
        kernel,
        out_shape=jax.ShapeDtypeStruct((nb, Bb, num_class), jnp.float32),
        grid=(nb,),
        in_specs=[
            pl.BlockSpec((None, R, T), lambda g: (g, 0, 0)),       # x block
            pl.BlockSpec((T, 2 * T), lambda g: (0, 0)),            # fwd DFT f32
            pl.BlockSpec((T, 2 * T), lambda g: (0, 0)),            # inv DFT bf16
            pl.BlockSpec((T, T), lambda g: (0, 0)),                # cumsum triu
            pl.BlockSpec((8, T), lambda g: (0, 0)),                # aux rows
            pl.BlockSpec((C, F, num_class), lambda g: (0, 0, 0)),  # weight
            pl.BlockSpec((1, num_class), lambda g: (0, 0)),        # bias
        ],
        out_specs=pl.BlockSpec((None, Bb, num_class), lambda g: (g, 0, 0)),
        compiler_params=pltpu.CompilerParams(
            dimension_semantics=("parallel",),
            vmem_limit_bytes=48 * 1024 * 1024),   # safe on v5e/v6e/v7x
    )(x3, dft_f32, idft_bf16, triu, aux, w3, b2)

    return out3.reshape(B, num_class)


if __name__ == "__main__":
    B, T, C = 2, 16, 4          # batch, seq_len, enc_in
    num_class = 3
    sampling_rate = 128.0

    n_one = T // 2 + 1
    F = 3 * T + n_one + 7
    in_dim = C * F              # configs.enc_in * (seq_len*3 + T//2+1 + 7)

    key = jax.random.PRNGKey(0)
    kx, kw, kb = jax.random.split(key, 3)
    x_enc = jax.random.normal(kx, (B, T, C), dtype=jnp.float32)

    # Synthetic nn.Linear(in_dim, num_class) parameters (weight.T layout).
    w_proj = (jax.random.normal(kw, (in_dim, num_class), dtype=jnp.float32)
              * (1.0 / np.sqrt(in_dim)))
    b_proj = (jax.random.normal(kb, (1, num_class), dtype=jnp.float32)
              * (1.0 / np.sqrt(in_dim)))

    logits = spectral_classifier_forward(x_enc, sampling_rate, w_proj, b_proj)
    logits = jax.block_until_ready(logits)

    assert logits.shape == (B, num_class)
    assert bool(jnp.all(jnp.isfinite(logits)))
    print("KERNEL_OK")
</pallas_src>

<mosaic_0001>
module attributes {stable_mosaic.version = 11 : i64} {
  func.func @_spectral_cls_kernel(%arg0: i32, %arg1: memref<1x4x16xf32, #tpu.memory_space<vmem>>, %arg2: memref<16x32xf32, #tpu.memory_space<vmem>>, %arg3: memref<16x32xbf16, #tpu.memory_space<vmem>>, %arg4: memref<16x16xf32, #tpu.memory_space<vmem>>, %arg5: memref<8x16xf32, #tpu.memory_space<vmem>>, %arg6: memref<4x64x3xf32, #tpu.memory_space<vmem>>, %arg7: memref<1x3xf32, #tpu.memory_space<vmem>>, %arg8: memref<1x1x3xf32, #tpu.memory_space<vmem>>) attributes {dimension_semantics = [#tpu.dimension_semantics<parallel>], iteration_bounds = array<i64: 2>, scalar_prefetch = 0 : i64, scratch_operands = 0 : i64, tpu.core_type = #tpu.core_type<tc>, window_params = [{transform_indices = @transform_0, window_bounds = array<i64: 1, 4, 16>}, {pipeline_mode = #tpu.pipeline_mode<synchronous>, transform_indices = @transform_1, window_bounds = array<i64: 16, 32>}, {pipeline_mode = #tpu.pipeline_mode<synchronous>, transform_indices = @transform_2, window_bounds = array<i64: 16, 32>}, {pipeline_mode = #tpu.pipeline_mode<synchronous>, transform_indices = @transform_3, window_bounds = array<i64: 16, 16>}, {pipeline_mode = #tpu.pipeline_mode<synchronous>, transform_indices = @transform_4, window_bounds = array<i64: 8, 16>}, {pipeline_mode = #tpu.pipeline_mode<synchronous>, transform_indices = @transform_5, window_bounds = array<i64: 4, 64, 3>}, {pipeline_mode = #tpu.pipeline_mode<synchronous>, transform_indices = @transform_6, window_bounds = array<i64: 1, 3>}, {transform_indices = @transform_7, window_bounds = array<i64: 1, 1, 3>}]} {
    %c0 = arith.constant 0 : index
    %c0_0 = arith.constant 0 : index
    %c0_1 = arith.constant 0 : index
    %0 = vector.load %arg1[%c0, %c0_0, %c0_1] : memref<1x4x16xf32, #tpu.memory_space<vmem>>, vector<1x4x16xf32>
    %1 = vector.shape_cast %0 : vector<1x4x16xf32> to vector<4x16xf32>
    %c0_2 = arith.constant 0 : index
    %c0_3 = arith.constant 0 : index
    %2 = vector.load %arg5[%c0_2, %c0_3] : memref<8x16xf32, #tpu.memory_space<vmem>>, vector<1x16xf32>
    %c1 = arith.constant 1 : index
    %c0_4 = arith.constant 0 : index
    %3 = vector.load %arg5[%c1, %c0_4] : memref<8x16xf32, #tpu.memory_space<vmem>>, vector<1x16xf32>
    %c2 = arith.constant 2 : index
    %c0_5 = arith.constant 0 : index
    %4 = vector.load %arg5[%c2, %c0_5] : memref<8x16xf32, #tpu.memory_space<vmem>>, vector<1x16xf32>
    %c3 = arith.constant 3 : index
    %c0_6 = arith.constant 0 : index
    %5 = vector.load %arg5[%c3, %c0_6] : memref<8x16xf32, #tpu.memory_space<vmem>>, vector<1x16xf32>
    %cst = arith.constant dense<0.000000e+00> : vector<4xf32>
    %6 = vector.multi_reduction <add>, %1, %cst [1] : vector<4x16xf32> to vector<4xf32>
    %7 = vector.shape_cast %6 : vector<4xf32> to vector<4x1xf32>
    %cst_7 = arith.constant 1.600000e+01 : f32
    %8 = vector.broadcast %cst_7 : f32 to vector<4x1xf32>
    %9 = arith.divf %7, %8 : vector<4x1xf32>
    %10 = vector.broadcast %9 : vector<4x1xf32> to vector<4x16xf32>
    %11 = arith.subf %1, %10 : vector<4x16xf32>
    %12 = vector.broadcast %3 : vector<1x16xf32> to vector<4x16xf32>
    %13 = arith.mulf %12, %11 : vector<4x16xf32>
    %14 = tpu.concatenate %1, %13 in 0 : vector<4x16xf32>, vector<4x16xf32> -> vector<8x16xf32>
    %c0_8 = arith.constant 0 : index
    %c0_9 = arith.constant 0 : index
    %15 = vector.load %arg2[%c0_8, %c0_9] : memref<16x32xf32, #tpu.memory_space<vmem>>, vector<16x32xf32>
    %cst_10 = arith.constant dense<0.000000e+00> : vector<8x32xf32>
    %16 = tpu.matmul %14, %15, %cst_10 {dimension_numbers = #tpu.dot_dimension_numbers<[1], [0], [0], [1], [0, 0, 1, 1], [], []>} : vector<8x16xf32>, vector<16x32xf32>, vector<8x32xf32> -> vector<8x32xf32>
    %17 = vector.extract_strided_slice %16 {offsets = [0, 0], sizes = [4, 16], strides = [1, 1]} : vector<8x32xf32> to vector<4x16xf32>
    %18 = vector.extract_strided_slice %16 {offsets = [0, 16], sizes = [4, 16], strides = [1, 1]} : vector<8x32xf32> to vector<4x16xf32>
    %cst_11 = arith.constant 0.000000e+00 : f32
    %19 = vector.broadcast %cst_11 : f32 to vector<4x16xf32>
    %20 = arith.subf %19, %18 : vector<4x16xf32>
    %21 = vector.extract_strided_slice %16 {offsets = [4, 0], sizes = [4, 16], strides = [1, 1]} : vector<8x32xf32> to vector<4x16xf32>
    %22 = vector.extract_strided_slice %16 {offsets = [4, 16], sizes = [4, 16], strides = [1, 1]} : vector<8x32xf32> to vector<4x16xf32>
    %23 = arith.mulf %17, %17 : vector<4x16xf32>
    %24 = arith.mulf %20, %20 : vector<4x16xf32>
    %25 = arith.addf %23, %24 : vector<4x16xf32>
    %26 = math.sqrt %25 : vector<4x16xf32>
    %27 = math.atan2 %20, %17 : vector<4x16xf32>
    %cst_12 = arith.constant 9.99999996E-13 : f32
    %28 = vector.broadcast %cst_12 : f32 to vector<4x16xf32>
    %29 = arith.addf %25, %28 : vector<4x16xf32>
    %30 = math.rsqrt %29 : vector<4x16xf32>
    %31 = arith.mulf %17, %30 : vector<4x16xf32>
    %cst_13 = arith.constant dense<0.000000e+00> : vector<4xf32>
    %32 = vector.multi_reduction <add>, %31, %cst_13 [1] : vector<4x16xf32> to vector<4xf32>
    %33 = vector.shape_cast %32 : vector<4xf32> to vector<4x1xf32>
    %cst_14 = arith.constant 1.600000e+01 : f32
    %34 = vector.broadcast %cst_14 : f32 to vector<4x1xf32>
    %35 = arith.divf %33, %34 : vector<4x1xf32>
    %36 = arith.mulf %35, %35 : vector<4x1xf32>
    %37 = arith.mulf %20, %30 : vector<4x16xf32>
    %cst_15 = arith.constant dense<0.000000e+00> : vector<4xf32>
    %38 = vector.multi_reduction <add>, %37, %cst_15 [1] : vector<4x16xf32> to vector<4xf32>
    %39 = vector.shape_cast %38 : vector<4xf32> to vector<4x1xf32>
    %cst_16 = arith.constant 1.600000e+01 : f32
    %40 = vector.broadcast %cst_16 : f32 to vector<4x1xf32>
    %41 = arith.divf %39, %40 : vector<4x1xf32>
    %42 = arith.mulf %41, %41 : vector<4x1xf32>
    %43 = arith.addf %36, %42 : vector<4x1xf32>
    %44 = math.sqrt %43 : vector<4x1xf32>
    %cst_17 = arith.constant dense<0.000000e+00> : vector<4xf32>
    %45 = vector.multi_reduction <add>, %25, %cst_17 [1] : vector<4x16xf32> to vector<4xf32>
    %46 = vector.shape_cast %45 : vector<4xf32> to vector<4x1xf32>
    %cst_18 = arith.constant 9.99999996E-13 : f32
    %47 = vector.broadcast %cst_18 : f32 to vector<4x1xf32>
    %48 = arith.addf %46, %47 : vector<4x1xf32>
    %49 = math.rsqrt %48 : vector<4x1xf32>
    %50 = vector.broadcast %49 : vector<4x1xf32> to vector<4x16xf32>
    %51 = arith.mulf %26, %50 : vector<4x16xf32>
    %cst_19 = arith.constant dense<0.000000e+00> : vector<4xf32>
    %52 = vector.multi_reduction <add>, %26, %cst_19 [1] : vector<4x16xf32> to vector<4xf32>
    %53 = vector.shape_cast %52 : vector<4xf32> to vector<4x1xf32>
    %cst_20 = arith.constant 9.99999996E-13 : f32
    %54 = vector.broadcast %cst_20 : f32 to vector<4x1xf32>
    %55 = arith.addf %53, %54 : vector<4x1xf32>
    %56 = tpu.reciprocal %55 {approx = true} : vector<4x1xf32> -> vector<4x1xf32>
    %57 = vector.broadcast %2 : vector<1x16xf32> to vector<4x16xf32>
    %58 = arith.mulf %57, %26 : vector<4x16xf32>
    %cst_21 = arith.constant dense<0.000000e+00> : vector<4xf32>
    %59 = vector.multi_reduction <add>, %58, %cst_21 [1] : vector<4x16xf32> to vector<4xf32>
    %60 = vector.shape_cast %59 : vector<4xf32> to vector<4x1xf32>
    %61 = arith.mulf %60, %56 : vector<4x1xf32>
    %c0_22 = arith.constant 0 : index
    %c0_23 = arith.constant 0 : index
    %62 = vector.load %arg4[%c0_22, %c0_23] : memref<16x16xf32, #tpu.memory_space<vmem>>, vector<16x16xf32>
    %cst_24 = arith.constant dense<0.000000e+00> : vector<4x16xf32>
    %63 = tpu.matmul %26, %62, %cst_24 {dimension_numbers = #tpu.dot_dimension_numbers<[1], [0], [0], [1], [0, 0, 1, 1], [], []>} : vector<4x16xf32>, vector<16x16xf32>, vector<4x16xf32> -> vector<4x16xf32>
    %64 = tpu.iota {dimensions = array<i32: 1>} : vector<4x16xi32>
    %65 = arith.sitofp %64 : vector<4x16xi32> to vector<4x16xf32>
    %cst_25 = arith.constant 8.500000e-01 : f32
    %66 = vector.broadcast %cst_25 : f32 to vector<4x1xf32>
    %67 = arith.mulf %66, %53 : vector<4x1xf32>
    %68 = vector.broadcast %67 : vector<4x1xf32> to vector<4x16xf32>
    %69 = arith.cmpf oge, %63, %68 : vector<4x16xf32>
    %cst_26 = arith.constant 1.600000e+01 : f32
    %70 = vector.broadcast %cst_26 : f32 to vector<4x16xf32>
    %71 = arith.select %69, %65, %70 : vector<4x16xi1>, vector<4x16xf32>
    %cst_27 = arith.constant dense<0x7F800000> : vector<4xf32>
    %72 = vector.multi_reduction <minimumf>, %71, %cst_27 [1] : vector<4x16xf32> to vector<4xf32>
    %73 = vector.shape_cast %72 : vector<4xf32> to vector<4x1xf32>
    %cst_28 = arith.constant dense<0xFF800000> : vector<4xf32>
    %74 = vector.multi_reduction <maximumf>, %26, %cst_28 [1] : vector<4x16xf32> to vector<4xf32>
    %75 = vector.shape_cast %74 : vector<4xf32> to vector<4x1xf32>
    %cst_29 = arith.constant dense<0.000000e+00> : vector<4xf32>
    %76 = vector.multi_reduction <add>, %26, %cst_29 [1] : vector<4x16xf32> to vector<4xf32>
    %77 = vector.shape_cast %76 : vector<4xf32> to vector<4x1xf32>
    %cst_30 = arith.constant 1.600000e+01 : f32
    %78 = vector.broadcast %cst_30 : f32 to vector<4x1xf32>
    %79 = arith.divf %77, %78 : vector<4x1xf32>
    %80 = arith.mulf %21, %21 : vector<4x16xf32>
    %81 = arith.mulf %22, %22 : vector<4x16xf32>
    %82 = arith.addf %80, %81 : vector<4x16xf32>
    %83 = vector.broadcast %5 : vector<1x16xf32> to vector<4x16xf32>
    %84 = arith.mulf %82, %83 : vector<4x16xf32>
    %85 = vector.extract_strided_slice %84 {offsets = [0, 0], sizes = [4, 9], strides = [1, 1]} : vector<4x16xf32> to vector<4x9xf32>
    %cst_31 = arith.constant 5.000000e-01 : f32
    %86 = vector.broadcast %cst_31 : f32 to vector<4x1xf32>
    %87 = arith.mulf %86, %53 : vector<4x1xf32>
    %88 = vector.broadcast %87 : vector<4x1xf32> to vector<4x16xf32>
    %89 = arith.cmpf oge, %63, %88 : vector<4x16xf32>
    %cst_32 = arith.constant 1.600000e+01 : f32
    %90 = vector.broadcast %cst_32 : f32 to vector<4x16xf32>
    %91 = arith.select %89, %65, %90 : vector<4x16xi1>, vector<4x16xf32>
    %cst_33 = arith.constant dense<0x7F800000> : vector<4xf32>
    %92 = vector.multi_reduction <minimumf>, %91, %cst_33 [1] : vector<4x16xf32> to vector<4xf32>
    %93 = vector.shape_cast %92 : vector<4xf32> to vector<4x1xf32>
    %94 = vector.broadcast %93 : vector<4x1xf32> to vector<4x16xf32>
    %95 = arith.cmpf oeq, %65, %94 : vector<4x16xf32>
    %96 = arith.extui %95 : vector<4x16xi1> to vector<4x16xi32>
    %97 = arith.sitofp %96 : vector<4x16xi32> to vector<4x16xf32>
    %98 = vector.broadcast %2 : vector<1x16xf32> to vector<4x16xf32>
    %99 = arith.mulf %98, %97 : vector<4x16xf32>
    %cst_34 = arith.constant dense<0.000000e+00> : vector<4xf32>
    %100 = vector.multi_reduction <add>, %99, %cst_34 [1] : vector<4x16xf32> to vector<4xf32>
    %101 = vector.shape_cast %100 : vector<4xf32> to vector<4x1xf32>
    %102 = vector.broadcast %4 : vector<1x16xf32> to vector<4x16xf32>
    %103 = arith.mulf %102, %17 : vector<4x16xf32>
    %104 = vector.broadcast %4 : vector<1x16xf32> to vector<4x16xf32>
    %105 = arith.mulf %104, %20 : vector<4x16xf32>
    %106 = tpu.concatenate %103, %105 in 0 : vector<4x16xf32>, vector<4x16xf32> -> vector<8x16xf32>
    %107 = arith.truncf %106 : vector<8x16xf32> to vector<8x16xbf16>
    %c0_35 = arith.constant 0 : index
    %c0_36 = arith.constant 0 : index
    %108 = vector.load %arg3[%c0_35, %c0_36] : memref<16x32xbf16, #tpu.memory_space<vmem>>, vector<16x32xbf16>
    %cst_37 = arith.constant dense<0.000000e+00> : vector<8x32xf32>
    %109 = tpu.matmul %107, %108, %cst_37 {dimension_numbers = #tpu.dot_dimension_numbers<[1], [0], [0], [1], [0, 0, 1, 1], [], []>} : vector<8x16xbf16>, vector<16x32xbf16>, vector<8x32xf32> -> vector<8x32xf32>
    %110 = vector.extract_strided_slice %109 {offsets = [0, 0], sizes = [4, 16], strides = [1, 1]} : vector<8x32xf32> to vector<4x16xf32>
    %111 = vector.extract_strided_slice %109 {offsets = [4, 16], sizes = [4, 16], strides = [1, 1]} : vector<8x32xf32> to vector<4x16xf32>
    %112 = arith.subf %110, %111 : vector<4x16xf32>
    %113 = vector.extract_strided_slice %109 {offsets = [0, 16], sizes = [4, 16], strides = [1, 1]} : vector<8x32xf32> to vector<4x16xf32>
    %114 = vector.extract_strided_slice %109 {offsets = [4, 0], sizes = [4, 16], strides = [1, 1]} : vector<8x32xf32> to vector<4x16xf32>
    %115 = arith.addf %113, %114 : vector<4x16xf32>
    %116 = arith.mulf %112, %112 : vector<4x16xf32>
    %117 = arith.mulf %115, %115 : vector<4x16xf32>
    %118 = arith.addf %116, %117 : vector<4x16xf32>
    %119 = math.sqrt %118 : vector<4x16xf32>
    %cst_38 = arith.constant dense<0.000000e+00> : vector<4xf32>
    %120 = vector.multi_reduction <add>, %118, %cst_38 [1] : vector<4x16xf32> to vector<4xf32>
    %121 = vector.shape_cast %120 : vector<4xf32> to vector<4x1xf32>
    %cst_39 = arith.constant 1.600000e+01 : f32
    %122 = vector.broadcast %cst_39 : f32 to vector<4x1xf32>
    %123 = arith.divf %121, %122 : vector<4x1xf32>
    %cst_40 = arith.constant dense<0.000000e+00> : vector<4xf32>
    %124 = vector.multi_reduction <add>, %119, %cst_40 [1] : vector<4x16xf32> to vector<4xf32>
    %125 = vector.shape_cast %124 : vector<4xf32> to vector<4x1xf32>
    %cst_41 = arith.constant 1.600000e+01 : f32
    %126 = vector.broadcast %cst_41 : f32 to vector<4x1xf32>
    %127 = arith.divf %125, %126 : vector<4x1xf32>
    %128 = arith.mulf %127, %127 : vector<4x1xf32>
    %129 = arith.subf %123, %128 : vector<4x1xf32>
    %cst_42 = arith.constant 0.000000e+00 : f32
    %130 = vector.broadcast %cst_42 : f32 to vector<4x1xf32>
    %131 = arith.maximumf %129, %130 : vector<4x1xf32>
    %132 = math.sqrt %131 : vector<4x1xf32>
    %133 = tpu.concatenate %27, %44, %26, %51, %61, %73, %75, %79, %85, %101, %132 in 1 : vector<4x16xf32>, vector<4x1xf32>, vector<4x16xf32>, vector<4x16xf32>, vector<4x1xf32>, vector<4x1xf32>, vector<4x1xf32>, vector<4x1xf32>, vector<4x9xf32>, vector<4x1xf32>, vector<4x1xf32> -> vector<4x64xf32>
    %cst_43 = arith.constant 0.000000e+00 : f32
    %134 = vector.broadcast %cst_43 : f32 to vector<1x3xf32>
    %135 = vector.extract_strided_slice %133 {offsets = [0, 0], sizes = [1, 64], strides = [1, 1]} : vector<4x64xf32> to vector<1x64xf32>
    %c0_44 = arith.constant 0 : index
    %c0_45 = arith.constant 0 : index
    %c0_46 = arith.constant 0 : index
    %136 = vector.load %arg6[%c0_44, %c0_45, %c0_46] : memref<4x64x3xf32, #tpu.memory_space<vmem>>, vector<1x64x3xf32>
    %137 = vector.shape_cast %136 : vector<1x64x3xf32> to vector<64x3xf32>
    %cst_47 = arith.constant dense<0.000000e+00> : vector<1x3xf32>
    %138 = tpu.matmul %135, %137, %cst_47 {dimension_numbers = #tpu.dot_dimension_numbers<[1], [0], [0], [1], [0, 0, 1, 1], [], []>} : vector<1x64xf32>, vector<64x3xf32>, vector<1x3xf32> -> vector<1x3xf32>
    %139 = arith.addf %134, %138 : vector<1x3xf32>
    %140 = vector.extract_strided_slice %133 {offsets = [1, 0], sizes = [1, 64], strides = [1, 1]} : vector<4x64xf32> to vector<1x64xf32>
    %c1_48 = arith.constant 1 : index
    %c0_49 = arith.constant 0 : index
    %c0_50 = arith.constant 0 : index
    %141 = vector.load %arg6[%c1_48, %c0_49, %c0_50] : memref<4x64x3xf32, #tpu.memory_space<vmem>>, vector<1x64x3xf32>
    %142 = vector.shape_cast %141 : vector<1x64x3xf32> to vector<64x3xf32>
    %cst_51 = arith.constant dense<0.000000e+00> : vector<1x3xf32>
    %143 = tpu.matmul %140, %142, %cst_51 {dimension_numbers = #tpu.dot_dimension_numbers<[1], [0], [0], [1], [0, 0, 1, 1], [], []>} : vector<1x64xf32>, vector<64x3xf32>, vector<1x3xf32> -> vector<1x3xf32>
    %144 = arith.addf %139, %143 : vector<1x3xf32>
    %145 = vector.extract_strided_slice %133 {offsets = [2, 0], sizes = [1, 64], strides = [1, 1]} : vector<4x64xf32> to vector<1x64xf32>
    %c2_52 = arith.constant 2 : index
    %c0_53 = arith.constant 0 : index
    %c0_54 = arith.constant 0 : index
    %146 = vector.load %arg6[%c2_52, %c0_53, %c0_54] : memref<4x64x3xf32, #tpu.memory_space<vmem>>, vector<1x64x3xf32>
    %147 = vector.shape_cast %146 : vector<1x64x3xf32> to vector<64x3xf32>
    %cst_55 = arith.constant dense<0.000000e+00> : vector<1x3xf32>
    %148 = tpu.matmul %145, %147, %cst_55 {dimension_numbers = #tpu.dot_dimension_numbers<[1], [0], [0], [1], [0, 0, 1, 1], [], []>} : vector<1x64xf32>, vector<64x3xf32>, vector<1x3xf32> -> vector<1x3xf32>
    %149 = arith.addf %144, %148 : vector<1x3xf32>
    %150 = vector.extract_strided_slice %133 {offsets = [3, 0], sizes = [1, 64], strides = [1, 1]} : vector<4x64xf32> to vector<1x64xf32>
    %c3_56 = arith.constant 3 : index
    %c0_57 = arith.constant 0 : index
    %c0_58 = arith.constant 0 : index
    %151 = vector.load %arg6[%c3_56, %c0_57, %c0_58] : memref<4x64x3xf32, #tpu.memory_space<vmem>>, vector<1x64x3xf32>
    %152 = vector.shape_cast %151 : vector<1x64x3xf32> to vector<64x3xf32>
    %cst_59 = arith.constant dense<0.000000e+00> : vector<1x3xf32>
    %153 = tpu.matmul %150, %152, %cst_59 {dimension_numbers = #tpu.dot_dimension_numbers<[1], [0], [0], [1], [0, 0, 1, 1], [], []>} : vector<1x64xf32>, vector<64x3xf32>, vector<1x3xf32> -> vector<1x3xf32>
    %154 = arith.addf %149, %153 : vector<1x3xf32>
    %c0_60 = arith.constant 0 : index
    %c0_61 = arith.constant 0 : index
    %155 = vector.load %arg7[%c0_60, %c0_61] : memref<1x3xf32, #tpu.memory_space<vmem>>, vector<1x3xf32>
    %156 = arith.addf %154, %155 : vector<1x3xf32>
    %c0_62 = arith.constant 0 : index
    %c0_63 = arith.constant 0 : index
    %c0_64 = arith.constant 0 : index
    %157 = vector.load %arg8[%c0_62, %c0_63, %c0_64] : memref<1x1x3xf32, #tpu.memory_space<vmem>>, vector<1x1x3xf32>
    %158 = vector.shape_cast %157 : vector<1x1x3xf32> to vector<1x3xf32>
    %159 = vector.shape_cast %156 : vector<1x3xf32> to vector<1x1x3xf32>
    tpu.vector_store %arg8[%c0_62, %c0_63, %c0_64], %159 {strides = array<i32>} : memref<1x1x3xf32, #tpu.memory_space<vmem>>, vector<1x1x3xf32>,
    return
  }
  func.func @transform_0(%arg0: i32) -> (i32, i32, i32) {
    %c0_i32 = arith.constant 0 : i32
    %c0_i32_0 = arith.constant 0 : i32
    %c0_i32_1 = arith.constant 0 : i32
    return %arg0, %c0_i32, %c0_i32_0 : i32, i32, i32
  }
  func.func @transform_1(%arg0: i32) -> (i32, i32) {
    %c0_i32 = arith.constant 0 : i32
    %c0_i32_0 = arith.constant 0 : i32
    %c0_i32_1 = arith.constant 0 : i32
    return %c0_i32, %c0_i32_0 : i32, i32
  }
  func.func @transform_2(%arg0: i32) -> (i32, i32) {
    %c0_i32 = arith.constant 0 : i32
    %c0_i32_0 = arith.constant 0 : i32
    %c0_i32_1 = arith.constant 0 : i32
    return %c0_i32, %c0_i32_0 : i32, i32
  }
  func.func @transform_3(%arg0: i32) -> (i32, i32) {
    %c0_i32 = arith.constant 0 : i32
    %c0_i32_0 = arith.constant 0 : i32
    %c0_i32_1 = arith.constant 0 : i32
    return %c0_i32, %c0_i32_0 : i32, i32
  }
  func.func @transform_4(%arg0: i32) -> (i32, i32) {
    %c0_i32 = arith.constant 0 : i32
    %c0_i32_0 = arith.constant 0 : i32
    %c0_i32_1 = arith.constant 0 : i32
    return %c0_i32, %c0_i32_0 : i32, i32
  }
  func.func @transform_5(%arg0: i32) -> (i32, i32, i32) {
    %c0_i32 = arith.constant 0 : i32
    %c0_i32_0 = arith.constant 0 : i32
    %c0_i32_1 = arith.constant 0 : i32
    %c0_i32_2 = arith.constant 0 : i32
    return %c0_i32, %c0_i32_0, %c0_i32_1 : i32, i32, i32
  }
  func.func @transform_6(%arg0: i32) -> (i32, i32) {
    %c0_i32 = arith.constant 0 : i32
    %c0_i32_0 = arith.constant 0 : i32
    %c0_i32_1 = arith.constant 0 : i32
    return %c0_i32, %c0_i32_0 : i32, i32
  }
  func.func @transform_7(%arg0: i32) -> (i32, i32, i32) {
    %c0_i32 = arith.constant 0 : i32
    %c0_i32_0 = arith.constant 0 : i32
    %c0_i32_1 = arith.constant 0 : i32
    return %arg0, %c0_i32, %c0_i32_0 : i32, i32, i32
  }
}

</mosaic_0001>

<llo_original>
// kernel: tpu_custom_call.1
$region0: #{tpu_custom_call.1}
  #allocation0 [shape = 'u32[]', space=smem, size = 0x4, offset = 0x4, fixed_abs, tag = 'smem constant byte address 0x4 - core index']
  #allocation1 [shape = 'u32[144,128]{1,0:T(1,128)}', space=vmem, size = 0x12000, scoped, tag = 'internal scratch']
  %s0 = inlined_call_operand.vmem [shape: f32[2,4,16], index: 0, kind: input, shape index: {}]
  %s1 = inlined_call_operand.vmem [shape: f32[16,32], index: 1, kind: input, shape index: {}]
  %s2 = inlined_call_operand.vmem [shape: bf16[16,32], index: 2, kind: input, shape index: {}]
  %s3 = inlined_call_operand.vmem [shape: f32[16,16], index: 3, kind: input, shape index: {}]
  %s4 = inlined_call_operand.vmem [shape: f32[8,16], index: 4, kind: input, shape index: {}]
  %s5 = inlined_call_operand.vmem [shape: f32[4,64,3], index: 5, kind: input, shape index: {}]
  %s6 = inlined_call_operand.vmem [shape: f32[1,3], index: 6, kind: input, shape index: {}]
  %s7 = inlined_call_operand.hbm [shape: f32[2,1,3], index: 7, kind: output, shape index: {}]
  %s8 = sld [smem:[#allocation0]]
  $region61: #{tpu_custom_call.1} parent=0
    _
  %s10 = ssub.s32 1, %s8
  %s11 = scalar_select 0, %s10, %s8
  $region1: #{tpu_custom_call.1} parent=0
    #allocation2 [shape = 'u8[1024]{0}', space=vmem, size = 0x400, scoped, tag = 'output window, operand 0']
    #allocation3 [shape = 's32[2]{0}', space=sflag, size = 0x8, scoped, tag = 'scoped memory for tpu_custom_call.1']
    %12 = vsyncpa [#allocation3], 0
    %s13 = scalar_lea.sflag [#allocation3], 1
    %14 = vsyncpa %s13, 0
    loop: start=0, step=1, limit=4
    $region2: #{tpu_custom_call.1} parent=1 // loop_pre_header
      _
    $region3: #{tpu_custom_call.1} parent=1 // loop_header
      %s16 = sphi 0, %s20
      %p17 = scmp.ge.s32.totalorder %s16, 4
      %s26 = sphi 0, %s28
      %s29 = sphi 0, %s26
      %s30 = sphi 0, %s29
      %s46 = sphi 0, %s30
      %s50 = sphi 0, %s50
      %s52 = sphi 0, %s50
      %s53 = sphi 0, %s52
      %s67 = sphi 0, %s53
      %s71 = sphi 0, %s71
      %s73 = sphi 0, %s71
      %s74 = sphi 0, %s73
      %s88 = sphi 0, %s74
      %s92 = sphi 0, %s92
      %s94 = sphi 0, %s92
      %s95 = sphi 0, %s94
      %s109 = sphi 0, %s95
      %s113 = sphi 0, %s113
      %s115 = sphi 0, %s113
      %s116 = sphi 0, %s115
      %s130 = sphi 0, %s116
      %s134 = sphi 0, %s134
      %s136 = sphi 0, %s134
      %s137 = sphi 0, %s136
      %s151 = sphi 0, %s137
      %s155 = sphi 0, %s155
      %s157 = sphi 0, %s155
      %s158 = sphi 0, %s157
      %s172 = sphi 0, %s158
      %s178 = sphi 0, %s180
      %s181 = sphi 0, %s178
      %s182 = sphi 0, %s181
      %s198 = sphi 0, %s182
    $region4: #{tpu_custom_call.1} parent=1 // loop_header_branch
      %19 = sbr.rel (%p17) target = $region8
    $region5: #{tpu_custom_call.1} parent=1 // loop_body
      %s21 = ssub.s32 %s16, 1
      %s22 = ssub.s32 %s16, 2
      %s23 = sadd.s32 %s16, 1
      %s24 = ssub.s32 %s16, %s23
      %p25 = scmp.eq.s32.totalorder %s24, 0
      %s27 = sadd.s32 %s26, 1
      %s28 = scalar_select %p25, %s26, %s27
      %p31 = pneg %p25
      %p32 = scmp.eq.s32.totalorder %s16, 1
      %p33 = por %p31, %p32
      %p34 = scmp.ne.s32.totalorder %s26, %s29
      %p35 = scmp.eq.s32.totalorder %s16, 0
      %p36 = por %p34, %p35
      %p37 = scmp.ne.s32.totalorder %s26, %s29
      %p38 = scmp.eq.s32.totalorder %s21, 1
      %p39 = por %p37, %p38
      %p40 = scmp.ne.s32.totalorder %s29, %s30
      %p41 = scmp.eq.s32.totalorder %s21, 0
      %p42 = por %p40, %p41
      %p43 = scmp.ne.s32.totalorder %s29, %s30
      %p44 = scmp.eq.s32.totalorder %s22, 1
      %p45 = por %p43, %p44
      %p47 = scmp.ne.s32.totalorder %s30, %s46
      %p48 = scmp.eq.s32.totalorder %s22, 0
      %p49 = por %p47, %p48
      %s51 = sadd.s32 %s50, 1
      %p54 = scmp.eq.s32.totalorder %s16, 1
      %p55 = scmp.ne.s32.totalorder %s50, %s52
      %p56 = scmp.eq.s32.totalorder %s16, 0
      %p57 = por %p55, %p56
      %p58 = scmp.ne.s32.totalorder %s50, %s52
      %p59 = scmp.eq.s32.totalorder %s21, 1
      %p60 = por %p58, %p59
      %p61 = scmp.ne.s32.totalorder %s52, %s53
      %p62 = scmp.eq.s32.totalorder %s21, 0
      %p63 = por %p61, %p62
      %p64 = scmp.ne.s32.totalorder %s52, %s53
      %p65 = scmp.eq.s32.totalorder %s22, 1
      %p66 = por %p64, %p65
      %p68 = scmp.ne.s32.totalorder %s53, %s67
      %p69 = scmp.eq.s32.totalorder %s22, 0
      %p70 = por %p68, %p69
      %s72 = sadd.s32 %s71, 1
      %p75 = scmp.eq.s32.totalorder %s16, 1
      %p76 = scmp.ne.s32.totalorder %s71, %s73
      %p77 = scmp.eq.s32.totalorder %s16, 0
      %p78 = por %p76, %p77
      %p79 = scmp.ne.s32.totalorder %s71, %s73
      %p80 = scmp.eq.s32.totalorder %s21, 1
      %p81 = por %p79, %p80
      %p82 = scmp.ne.s32.totalorder %s73, %s74
      %p83 = scmp.eq.s32.totalorder %s21, 0
      %p84 = por %p82, %p83
      %p85 = scmp.ne.s32.totalorder %s73, %s74
      %p86 = scmp.eq.s32.totalorder %s22, 1
      %p87 = por %p85, %p86
      %p89 = scmp.ne.s32.totalorder %s74, %s88
      %p90 = scmp.eq.s32.totalorder %s22, 0
      %p91 = por %p89, %p90
      %s93 = sadd.s32 %s92, 1
      %p96 = scmp.eq.s32.totalorder %s16, 1
      %p97 = scmp.ne.s32.totalorder %s92, %s94
      %p98 = scmp.eq.s32.totalorder %s16, 0
      %p99 = por %p97, %p98
      %p100 = scmp.ne.s32.totalorder %s92, %s94
      %p101 = scmp.eq.s32.totalorder %s21, 1
      %p102 = por %p100, %p101
      %p103 = scmp.ne.s32.totalorder %s94, %s95
      %p104 = scmp.eq.s32.totalorder %s21, 0
      %p105 = por %p103, %p104
      %p106 = scmp.ne.s32.totalorder %s94, %s95
      %p107 = scmp.eq.s32.totalorder %s22, 1
      %p108 = por %p106, %p107
      %p110 = scmp.ne.s32.totalorder %s95, %s109
      %p111 = scmp.eq.s32.totalorder %s22, 0
      %p112 = por %p110, %p111
      %s114 = sadd.s32 %s113, 1
      %p117 = scmp.eq.s32.totalorder %s16, 1
      %p118 = scmp.ne.s32.totalorder %s113, %s115
      %p119 = scmp.eq.s32.totalorder %s16, 0
      %p120 = por %p118, %p119
      %p121 = scmp.ne.s32.totalorder %s113, %s115
      %p122 = scmp.eq.s32.totalorder %s21, 1
      %p123 = por %p121, %p122
      %p124 = scmp.ne.s32.totalorder %s115, %s116
      %p125 = scmp.eq.s32.totalorder %s21, 0
      %p126 = por %p124, %p125
      %p127 = scmp.ne.s32.totalorder %s115, %s116
      %p128 = scmp.eq.s32.totalorder %s22, 1
      %p129 = por %p127, %p128
      %p131 = scmp.ne.s32.totalorder %s116, %s130
      %p132 = scmp.eq.s32.totalorder %s22, 0
      %p133 = por %p131, %p132
      %s135 = sadd.s32 %s134, 1
      %p138 = scmp.eq.s32.totalorder %s16, 1
      %p139 = scmp.ne.s32.totalorder %s134, %s136
      %p140 = scmp.eq.s32.totalorder %s16, 0
      %p141 = por %p139, %p140
      %p142 = scmp.ne.s32.totalorder %s134, %s136
      %p143 = scmp.eq.s32.totalorder %s21, 1
      %p144 = por %p142, %p143
      %p145 = scmp.ne.s32.totalorder %s136, %s137
      %p146 = scmp.eq.s32.totalorder %s21, 0
      %p147 = por %p145, %p146
      %p148 = scmp.ne.s32.totalorder %s136, %s137
      %p149 = scmp.eq.s32.totalorder %s22, 1
      %p150 = por %p148, %p149
      %p152 = scmp.ne.s32.totalorder %s137, %s151
      %p153 = scmp.eq.s32.totalorder %s22, 0
      %p154 = por %p152, %p153
      %s156 = sadd.s32 %s155, 1
      %p159 = scmp.eq.s32.totalorder %s16, 1
      %p160 = scmp.ne.s32.totalorder %s155, %s157
      %p161 = scmp.eq.s32.totalorder %s16, 0
      %p162 = por %p160, %p161
      %p163 = scmp.ne.s32.totalorder %s155, %s157
      %p164 = scmp.eq.s32.totalorder %s21, 1
      %p165 = por %p163, %p164
      %p166 = scmp.ne.s32.totalorder %s157, %s158
      %p167 = scmp.eq.s32.totalorder %s21, 0
      %p168 = por %p166, %p167
      %p169 = scmp.ne.s32.totalorder %s157, %s158
      %p170 = scmp.eq.s32.totalorder %s22, 1
      %p171 = por %p169, %p170
      %p173 = scmp.ne.s32.totalorder %s158, %s172
      %p174 = scmp.eq.s32.totalorder %s22, 0
      %p175 = por %p173, %p174
      %s176 = ssub.s32 %s16, %s23
      %p177 = scmp.eq.s32.totalorder %s176, 0
      %s179 = sadd.s32 %s178, 1
      %s180 = scalar_select %p177, %s178, %s179
      %p183 = pneg %p177
      %p184 = scmp.eq.s32.totalorder %s16, 1
      %p185 = por %p183, %p184
      %p186 = scmp.ne.s32.totalorder %s178, %s181
      %p187 = scmp.eq.s32.totalorder %s16, 0
      %p188 = por %p186, %p187
      %p189 = scmp.ne.s32.totalorder %s178, %s181
      %p190 = scmp.eq.s32.totalorder %s21, 1
      %p191 = por %p189, %p190
      %p192 = scmp.ne.s32.totalorder %s181, %s182
      %p193 = scmp.eq.s32.totalorder %s21, 0
      %p194 = por %p192, %p193
      %p195 = scmp.ne.s32.totalorder %s181, %s182
      %p196 = scmp.eq.s32.totalorder %s22, 1
      %p197 = por %p195, %p196
      %p199 = scmp.ne.s32.totalorder %s182, %s198
      %p200 = scmp.eq.s32.totalorder %s22, 0
      %p201 = por %p199, %p200
      %p202 = scmp.le.s32.totalorder 1, %s16
      %p203 = scmp.lt.s32.totalorder %s16, 3
      %p204 = pnand %p202, %p203
      %p205 = pneg %p204
      // Predicated region
      $region9: #{tpu_custom_call.1} parent=5 // pred_check
        _
      $region10: #{tpu_custom_call.1} parent=5 // pred_check_branch
        %207 = sbr.rel (%p204) target = $region12
      $region11: #{tpu_custom_call.1} parent=5 // pred_region
        %s208 = ssub.s32 %s16, 1
        // Predicated region
        $region13: #{tpu_custom_call.1} parent=11 // pred_check
          %p209 = pneg %p63
        $region14: #{tpu_custom_call.1} parent=11 // pred_check_branch
          %211 = sbr.rel (%p209) target = $region16
        $region15: #{tpu_custom_call.1} parent=11 // pred_region
          _
        $region16: #{tpu_custom_call.1} parent=11 // pred_fallthru
          _
        // Predicated region
        $region17: #{tpu_custom_call.1} parent=11 // pred_check
          %p212 = pneg %p84
        $region18: #{tpu_custom_call.1} parent=11 // pred_check_branch
          %214 = sbr.rel (%p212) target = $region20
        $region19: #{tpu_custom_call.1} parent=11 // pred_region
          _
        $region20: #{tpu_custom_call.1} parent=11 // pred_fallthru
          _
        // Predicated region
        $region21: #{tpu_custom_call.1} parent=11 // pred_check
          %p215 = pneg %p105
        $region22: #{tpu_custom_call.1} parent=11 // pred_check_branch
          %217 = sbr.rel (%p215) target = $region24
        $region23: #{tpu_custom_call.1} parent=11 // pred_region
          _
        $region24: #{tpu_custom_call.1} parent=11 // pred_fallthru
          _
        // Predicated region
        $region25: #{tpu_custom_call.1} parent=11 // pred_check
          %p218 = pneg %p126
        $region26: #{tpu_custom_call.1} parent=11 // pred_check_branch
          %220 = sbr.rel (%p218) target = $region28
        $region27: #{tpu_custom_call.1} parent=11 // pred_region
          _
        $region28: #{tpu_custom_call.1} parent=11 // pred_fallthru
          _
        // Predicated region
        $region29: #{tpu_custom_call.1} parent=11 // pred_check
          %p221 = pneg %p147
        $region30: #{tpu_custom_call.1} parent=11 // pred_check_branch
          %223 = sbr.rel (%p221) target = $region32
        $region31: #{tpu_custom_call.1} parent=11 // pred_region
          _
        $region32: #{tpu_custom_call.1} parent=11 // pred_fallthru
          _
        // Predicated region
        $region33: #{tpu_custom_call.1} parent=11 // pred_check
          %p224 = pneg %p168
        $region34: #{tpu_custom_call.1} parent=11 // pred_check_branch
          %226 = sbr.rel (%p224) target = $region36
        $region35: #{tpu_custom_call.1} parent=11 // pred_region
          _
        $region36: #{tpu_custom_call.1} parent=11 // pred_fallthru
          _
      $region12: #{tpu_custom_call.1} parent=5 // pred_fallthru
        _
      %p227 = scmp.lt.s32.totalorder %s16, 2
      // Predicated region
      $region37: #{tpu_custom_call.1} parent=5 // pred_check
        %p228 = pneg %p227
      $region38: #{tpu_custom_call.1} parent=5 // pred_check_branch
        %230 = sbr.rel (%p228) target = $region40
      $region39: #{tpu_custom_call.1} parent=5 // pred_region
        // Predicated region
        $region41: #{tpu_custom_call.1} parent=39 // pred_check
          %p231 = pneg %p36
        $region42: #{tpu_custom_call.1} parent=39 // pred_check_branch
          %233 = sbr.rel (%p231) target = $region44
        $region43: #{tpu_custom_call.1} parent=39 // pred_region
          %p234 = scmp.lt.s32.totalorder %s16, 1
          %s235 = scalar_select %p234, %s16, 1
          %s236 = smul.addr %s235, 4
          %s237 = scalar_lea.vmem %s0, %s236
        $region44: #{tpu_custom_call.1} parent=39 // pred_fallthru
          _
      $region40: #{tpu_custom_call.1} parent=5 // pred_fallthru
        _
      %p238 = scmp.le.s32.totalorder 1, %s16
      %p239 = scmp.lt.s32.totalorder %s16, 3
      %p240 = pnand %p238, %p239
      %p241 = pneg %p240
      // Predicated region
      $region45: #{tpu_custom_call.1} parent=5 // pred_check
        _
      $region46: #{tpu_custom_call.1} parent=5 // pred_check_branch
        %243 = sbr.rel (%p240) target = $region48
      $region47: #{tpu_custom_call.1} parent=5 // pred_region
        %s244 = ssub.s32 %s16, 1
        %p245 = scmp.lt.s32.totalorder %s21, 1
        %s246 = scalar_select %p245, %s21, 1
        %s247 = smul.addr %s246, 4
        %s248 = scalar_lea.vmem %s0, %s247
        %p249 = pneg %p42
        %p250 = pneg %p39
        %p251 = pneg %p63
        %p252 = pneg %p60
        %p253 = pneg %p84
        %p254 = pneg %p81
        %p255 = pneg %p105
        %p256 = pneg %p102
        %p257 = pneg %p126
        %p258 = pneg %p123
        %p259 = pneg %p147
        %p260 = pneg %p144
        %p261 = pneg %p168
        %p262 = pneg %p165
        %p263 = pneg %p194
        %p264 = pneg %p191
        %s265 = sand.u32 %s181, 1
        %s266 = scalar_lea.sflag [#allocation3], %s265
        %s267 = sand.u32 %s181, 1
        %s268 = scalar_lea.vmem [#allocation2], %s267
        %p269 = scmp.lt.s32.totalorder %s21, 1
        %s270 = scalar_select %p269, %s21, 1
        %s271 = smul.addr %s270, 4
        %s272 = scalar_lea.vmem %s0, %s271
        %v274 = vld [vmem:[%s272] sm:$0xf]
        %v275 = vld [vmem:[%s4] sm:$0x1]
        %v276 = vld [vmem:[%s4 + $0x1] sm:$0x1]
        %v277 = vld [vmem:[%s4 + $0x2] sm:$0x1]
        %v278 = vld [vmem:[%s4 + $0x3] sm:$0x1]
        %vm279 = vcmask 125952
        %v280 = vsel %vm279, %v274, 0.0
        %281 = vadd.xlane.f32.xlu0 %v280
        %v282 = vpop.xlane.xlu0 %281
        %v283 = vrcp.pop 16.0
        %v284 = vmul.f32 %v282, %v283
        %v285 = vsub.f32 %v274, %v284
        %v286 = vlaneseq
        %v287 = vshrl.u32 %v286, 7
        %v288 = vsub.s32 0, %v287
        %v289 = vrot.slane %v276, %v288
        %v290 = vmul.f32 %v289, %v285
        %v292 = vrot.slane %v290, 4
        %vm294 = vcmask 1043456
        %v295 = vsel %vm294, %v274, %v292
        %v296 = vld [vmem:[%s1] sm:$0xff]
        %v297 = vld [vmem:[%s1 + $0x8] sm:$0xff]
        %vm298 = vcmask 130048
        %v300 = vsel %vm298, %v295, 0
        %302 = vmatprep.subr.mxu0 0.0
        %303 = vmatpush1.msra.mxu0 0.0
        %304 = vmatprep.subr.mxu0 0.0
        %305 = vmatpush1.msra.mxu0 0.0
        %306 = vmatprep.subr.mxu0 0.0
        %307 = vmatpush1.msra.mxu0 0.0
        %308 = vmatprep.subr.mxu0 0.0
        %309 = vmatpush1.msra.mxu0 0.0
        %310 = vmatprep.subr.mxu0 0.0
        %311 = vmatpush1.msra.mxu0 0.0
        %312 = vmatprep.subr.mxu0 0.0
        %313 = vmatpush1.msra.mxu0 0.0
        %314 = vmatprep.subr.mxu0 0.0
        %315 = vmatpush1.msra.mxu0 0.0
        %316 = vmatprep.subr.mxu0 0.0
        %317 = vmatpush1.msra.mxu0 0.0
        %318 = vmatprep.subr.mxu0 0.0
        %319 = vmatpush1.msra.mxu0 0.0
        %320 = vmatprep.subr.mxu0 0.0
        %321 = vmatpush1.msra.mxu0 0.0
        %322 = vmatprep.subr.mxu0 0.0
        %323 = vmatpush1.msra.mxu0 0.0
        %324 = vmatprep.subr.mxu0 0.0
        %325 = vmatpush1.msra.mxu0 0.0
        %326 = vmatprep.subr.mxu0 0.0
        %327 = vmatpush1.msra.mxu0 0.0
        %328 = vmatprep.subr.mxu0 0.0
        %329 = vmatpush1.msra.mxu0 0.0
        %330 = vmatprep.subr.mxu0 0.0
        %331 = vmatpush1.msra.mxu0 %v297
        %332 = vmatprep.subr.mxu0 0.0
        %333 = vmatpush1.msra.mxu0 %v296
        %334 = vmatprep.subr.mxu0 0.0
        %335 = vmatpush2.msra.mxu0 0.0
        %336 = vmatprep.subr.mxu0 0.0
        %337 = vmatpush2.msra.mxu0 0.0
        %338 = vmatprep.subr.mxu0 0.0
        %339 = vmatpush2.msra.mxu0 0.0
        %340 = vmatprep.subr.mxu0 0.0
        %341 = vmatpush2.msra.mxu0 0.0
        %342 = vmatprep.subr.mxu0 0.0
        %343 = vmatpush2.msra.mxu0 0.0
        %344 = vmatprep.subr.mxu0 0.0
        %345 = vmatpush2.msra.mxu0 0.0
        %346 = vmatprep.subr.mxu0 0.0
        %347 = vmatpush2.msra.mxu0 0.0
        %348 = vmatprep.subr.mxu0 0.0
        %349 = vmatpush2.msra.mxu0 0.0
        %350 = vmatprep.subr.mxu0 0.0
        %351 = vmatpush2.msra.mxu0 0.0
        %352 = vmatprep.subr.mxu0 0.0
        %353 = vmatpush2.msra.mxu0 0.0
        %354 = vmatprep.subr.mxu0 0.0
        %355 = vmatpush2.msra.mxu0 0.0
        %356 = vmatprep.subr.mxu0 0.0
        %357 = vmatpush2.msra.mxu0 0.0
        %358 = vmatprep.subr.mxu0 0.0
        %359 = vmatpush2.msra.mxu0 0.0
        %360 = vmatprep.subr.mxu0 0.0
        %361 = vmatpush2.msra.mxu0 0.0
        %362 = vmatprep.subr.mxu0 0.0
        %363 = vmatpush2.msra.mxu0 0.0
        %364 = vmatprep.subr.mxu0 0.0
        %365 = vmatpush2.msra.mxu0 0.0
        %366 = vmatprep.mubr.f32.mxu0 0.0
        %367 = vmatmul.mubr.f32.gmra.mxu0 %v300
        %v368 = vpop.f32.mrf.mxu0
        %v369 = vadd.f32 0.0, %v368
        %v370 = vpop.f32.mrf.mxu0
        %371 = vdwg.mxu0
        %v372 = vsub.f32 0.0, %v369
        %v373 = vmul.f32 %v369, %v369
        %v374 = vmul.f32 %v372, %v372
        %376 = vrot.lane.b32.xlu0 %v374, 112
        %v377 = vpop.permute.xlu0 %376
        %v379 = vadd.f32 %v373, %v377
        %v380 = vrsqrt.pop %v379
        %v381 = vmul.f32 %v379, %v380
        %vm382 = vcmp.eq.f32.partialorder %v379, inf
        %v383 = vsel %vm382, %v379, %v381
        %vm384 = vcmp.eq.f32.partialorder %v379, 0.0
        %v385 = vand.u32 %v379, 2147483648
        %v386 = vsel %vm384, %v385, %v383
        %388 = vrot.lane.b32.xlu0 %v369, 16
        %v389 = vpop.permute.xlu0 %388
        %v391 = vand.u32 2147483647, %v389
        %v392 = vand.u32 2147483647, %v372
        %v393 = vmin.f32 %v391, %v392
        %v394 = vmax.f32 %v391, %v392
        %v395 = vrcp.pop %v394
        %v396 = vmul.f32 %v393, %v395
        %v397 = vmul.f32 %v396, %v396
        %v398 = vmul.f32 0.002785687, %v397
        %v399 = vadd.f32 %v398, -0.015866
        %v400 = vmul.f32 %v399, %v397
        %v401 = vadd.f32 %v400, 0.04247222
        %v402 = vmul.f32 %v401, %v397
        %v403 = vadd.f32 %v402, -0.074975304
        %v404 = vmul.f32 %v403, %v397
        %v405 = vadd.f32 %v404, 0.1064488
        %v406 = vmul.f32 %v405, %v397
        %v407 = vadd.f32 %v406, -0.14207031
        %v408 = vmul.f32 %v407, %v397
        %v409 = vadd.f32 %v408, 0.19993454
        %v410 = vmul.f32 %v409, %v397
        %v411 = vadd.f32 %v410, -0.33333147
        %v412 = vmul.f32 %v411, %v397
        %v413 = vmul.f32 %v412, %v396
        %v414 = vadd.f32 %v413, %v396
        %vm415 = vcmp.gt.f32.partialorder %v392, %v391
        %v416 = vsub.f32 1.5707964, %v414
        %v417 = vsel %vm415, %v416, %v414
        %vm418 = vcmp.lt.f32.partialorder %v389, 0.0
        %v419 = vsub.f32 3.1415927, %v417
        %v420 = vsel %vm418, %v419, %v417
        %vm421 = vcmp.lt.s32.totalorder %v389, 0
        %v422 = vsel %vm421, 3.1415927, 0.0
        %vm423 = vcmp.eq.f32.partialorder %v372, 0.0
        %v424 = vsel %vm423, %v422, %v420
        %vm425 = vcmp.ne.f32.partialorder %v389, %v389
        %vm426 = vcmp.ne.f32.partialorder %v372, %v372
        %vm427 = vmor %vm425, %vm426
        %v428 = vsel %vm427, nan, %v424
        %vm429 = vcmp.lt.f32.partialorder %v389, 0.0
        %v430 = vsel %vm429, 2.3561945, 0.7853982
        %vm431 = vcmp.eq.s32.totalorder %v391, inf
        %vm432 = vcmp.eq.s32.totalorder %v392, inf
        %vm433 = vmand %vm431, %vm432
        %v434 = vsel %vm433, %v430, %v428
        %v435 = vand.u32 2147483647, %v434
        %v436 = vand.u32 %v372, 2147483648
        %v437 = vor.u32 %v435, %v436
        %v438 = vadd.f32 %v379, 1e-12
        %v439 = vrsqrt.pop %v438
        %v440 = vmul.f32 %v369, %v439
        %v441 = vsel %vm279, %v440, 0.0
        %442 = vadd.xlane.f32.xlu0 %v441
        %v443 = vpop.xlane.xlu0 %442
        %v444 = vmul.f32 %v443, %v283
        %v445 = vmul.f32 %v444, %v444
        %447 = vrot.lane.b32.xlu0 %v439, 16
        %v448 = vpop.permute.xlu0 %447
        %v450 = vmul.f32 %v372, %v448
        %452 = vrot.lane.b32.xlu0 %v450, 112
        %v453 = vpop.permute.xlu0 %452
        %v455 = vsel %vm279, %v453, 0.0
        %456 = vadd.xlane.f32.xlu0 %v455
        %v457 = vpop.xlane.xlu0 %456
        %v458 = vmul.f32 %v457, %v283
        %v459 = vmul.f32 %v458, %v458
        %v460 = vadd.f32 %v445, %v459
        %v461 = vrsqrt.pop %v460
        %v462 = vmul.f32 %v460, %v461
        %vm463 = vcmp.eq.f32.partialorder %v460, inf
        %v464 = vsel %vm463, %v460, %v462
        %vm465 = vcmp.eq.f32.partialorder %v460, 0.0
        %v466 = vand.u32 %v460, 2147483648
        %v467 = vsel %vm465, %v466, %v464
        %v468 = vsel %vm279, %v379, 0.0
        %469 = vadd.xlane.f32.xlu0 %v468
        %v470 = vpop.xlane.xlu0 %469
        %v471 = vadd.f32 %v470, 1e-12
        %v472 = vrsqrt.pop %v471
        %v473 = vmul.f32 %v386, %v472
        %v474 = vsel %vm279, %v386, 0.0
        %475 = vadd.xlane.f32.xlu0 %v474
        %v476 = vpop.xlane.xlu0 %475
        %v477 = vadd.f32 %v476, 1e-12
        %v478 = vrcp.pop %v477
        %v479 = vlaneseq
        %v480 = vshrl.u32 %v479, 7
        %v481 = vsub.s32 0, %v480
        %v482 = vrot.slane %v275, %v481
        %v483 = vmul.f32 %v482, %v386
        %v484 = vsel %vm279, %v483, 0.0
        %485 = vadd.xlane.f32.xlu0 %v484
        %v486 = vpop.xlane.xlu0 %485
        %v487 = vmul.f32 %v486, %v478
        %v488 = vld [vmem:[%s3] sm:$0xff]
        %v489 = vld [vmem:[%s3 + $0x8] sm:$0xff]
        %v491 = vsel %vm298, %v386, 0
        %493 = vmatprep.subr.mxu0 0.0
        %494 = vmatpush1.msra.mxu0 0.0
        %495 = vmatprep.subr.mxu0 0.0
        %496 = vmatpush1.msra.mxu0 0.0
        %497 = vmatprep.subr.mxu0 0.0
        %498 = vmatpush1.msra.mxu0 0.0
        %499 = vmatprep.subr.mxu0 0.0
        %500 = vmatpush1.msra.mxu0 0.0
        %501 = vmatprep.subr.mxu0 0.0
        %502 = vmatpush1.msra.mxu0 0.0
        %503 = vmatprep.subr.mxu0 0.0
        %504 = vmatpush1.msra.mxu0 0.0
        %505 = vmatprep.subr.mxu0 0.0
        %506 = vmatpush1.msra.mxu0 0.0
        %507 = vmatprep.subr.mxu0 0.0
        %508 = vmatpush1.msra.mxu0 0.0
        %509 = vmatprep.subr.mxu0 0.0
        %510 = vmatpush1.msra.mxu0 0.0
        %511 = vmatprep.subr.mxu0 0.0
        %512 = vmatpush1.msra.mxu0 0.0
        %513 = vmatprep.subr.mxu0 0.0
        %514 = vmatpush1.msra.mxu0 0.0
        %515 = vmatprep.subr.mxu0 0.0
        %516 = vmatpush1.msra.mxu0 0.0
        %517 = vmatprep.subr.mxu0 0.0
        %518 = vmatpush1.msra.mxu0 0.0
        %519 = vmatprep.subr.mxu0 0.0
        %520 = vmatpush1.msra.mxu0 0.0
        %521 = vmatprep.subr.mxu0 0.0
        %522 = vmatpush1.msra.mxu0 %v489
        %523 = vmatprep.subr.mxu0 0.0
        %524 = vmatpush1.msra.mxu0 %v488
        %525 = vmatprep.subr.mxu0 0.0
        %526 = vmatpush2.msra.mxu0 0.0
        %527 = vmatprep.subr.mxu0 0.0
        %528 = vmatpush2.msra.mxu0 0.0
        %529 = vmatprep.subr.mxu0 0.0
        %530 = vmatpush2.msra.mxu0 0.0
        %531 = vmatprep.subr.mxu0 0.0
        %532 = vmatpush2.msra.mxu0 0.0
        %533 = vmatprep.subr.mxu0 0.0
        %534 = vmatpush2.msra.mxu0 0.0
        %535 = vmatprep.subr.mxu0 0.0
        %536 = vmatpush2.msra.mxu0 0.0
        %537 = vmatprep.subr.mxu0 0.0
        %538 = vmatpush2.msra.mxu0 0.0
        %539 = vmatprep.subr.mxu0 0.0
        %540 = vmatpush2.msra.mxu0 0.0
        %541 = vmatprep.subr.mxu0 0.0
        %542 = vmatpush2.msra.mxu0 0.0
        %543 = vmatprep.subr.mxu0 0.0
        %544 = vmatpush2.msra.mxu0 0.0
        %545 = vmatprep.subr.mxu0 0.0
        %546 = vmatpush2.msra.mxu0 0.0
        %547 = vmatprep.subr.mxu0 0.0
        %548 = vmatpush2.msra.mxu0 0.0
        %549 = vmatprep.subr.mxu0 0.0
        %550 = vmatpush2.msra.mxu0 0.0
        %551 = vmatprep.subr.mxu0 0.0
        %552 = vmatpush2.msra.mxu0 0.0
        %553 = vmatprep.subr.mxu0 0.0
        %554 = vmatpush2.msra.mxu0 0.0
        %555 = vmatprep.subr.mxu0 0.0
        %556 = vmatpush2.msra.mxu0 0.0
        %557 = vmatprep.mubr.f32.mxu0 0.0
        %558 = vmatmul.mubr.f32.gmra.mxu0 %v491
        %v559 = vpop.f32.mrf.mxu0
        %v560 = vadd.f32 0.0, %v559
        %v561 = vpop.f32.mrf.mxu0
        %562 = vdwg.mxu0
        %v563 = vlaneseq
        %v564 = vand.u32 %v563, 127
        %v565 = vcvt.s32.f32 %v564
        %v566 = vmul.f32 %v476, 0.85
        %vm567 = vcmp.ge.f32.partialorder %v560, %v566
        %v568 = vsel %vm567, %v565, 16.0
        %v569 = vsel %vm279, %v568, inf
        %570 = vmin.xlane.f32.xlu0 %v569
        %v571 = vpop.xlane.xlu0 %570
        %v572 = vsel %vm279, %v386, -inf
        %573 = vmax.xlane.f32.xlu0 %v572
        %v574 = vpop.xlane.xlu0 %573
        %v575 = vmul.f32 %v476, %v283
        %577 = vrot.lane.b32.xlu0 %v373, 112
        %v578 = vpop.permute.xlu0 %577
        %v580 = vadd.f32 %v373, %v578
        %v581 = vlaneseq
        %v582 = vshrl.u32 %v581, 7
        %v583 = vsub.s32 0, %v582
        %v584 = vrot.slane %v278, %v583
        %v585 = vmul.f32 %v580, %v584
        %v586 = vmul.f32 %v476, 0.5
        %vm587 = vcmp.ge.f32.partialorder %v560, %v586
        %v588 = vsel %vm587, %v565, 16.0
        %v589 = vsel %vm279, %v588, inf
        %590 = vmin.xlane.f32.xlu0 %v589
        %v591 = vpop.xlane.xlu0 %590
        %vm592 = vcmp.eq.f32.partialorder %v565, %v591
        %v593 = vsel %vm592, 1, 0
        %v594 = vcvt.s32.f32 %v593
        %v595 = vmul.f32 %v482, %v594
        %v596 = vsel %vm279, %v595, 0.0
        %597 = vadd.xlane.f32.xlu0 %v596
        %v598 = vpop.xlane.xlu0 %597
        %v599 = vlaneseq
        %v600 = vshrl.u32 %v599, 7
        %v601 = vsub.s32 0, %v600
        %v602 = vrot.slane %v277, %v601
        %v603 = vmul.f32 %v602, %v369
        %605 = vrot.lane.b32.xlu0 %v372, 112
        %v606 = vpop.permute.xlu0 %605
        %v608 = vmul.f32 %v602, %v606
        %v610 = vrot.slane %v608, 4
        %v612 = vsel %vm294, %v603, %v610
        %v613 = vpack.c.bf16 %v612, %v612
        %v614 = vld [vmem:[%s2] sm:$0xf]
        %v615 = vld [vmem:[%s2 + $0x4] sm:$0xf]
        %v618 = vunpack.c.l.b16 %v614
        %v619 = vunpack.c.l.b16 %v615
        %v620 = vpack.c.b16 %v619, %v618
        %v623 = vsel %vm298, %v613, 0
        %625 = vmatprep.subr.bf16.mxu0 0
        %626 = vmatpush1.bf16.msra.mxu0 0
        %627 = vmatprep.subr.bf16.mxu0 0
        %628 = vmatpush1.bf16.msra.mxu0 0
        %629 = vmatprep.subr.bf16.mxu0 0
        %630 = vmatpush1.bf16.msra.mxu0 0
        %631 = vmatprep.subr.bf16.mxu0 0
        %632 = vmatpush1.bf16.msra.mxu0 0
        %633 = vmatprep.subr.bf16.mxu0 0
        %634 = vmatpush1.bf16.msra.mxu0 0
        %635 = vmatprep.subr.bf16.mxu0 0
        %636 = vmatpush1.bf16.msra.mxu0 0
        %637 = vmatprep.subr.bf16.mxu0 0
        %638 = vmatpush1.bf16.msra.mxu0 0
        %639 = vmatprep.subr.bf16.mxu0 0
        %640 = vmatpush1.bf16.msra.mxu0 %v620
        %641 = vmatprep.subr.bf16.mxu0 0
        %642 = vmatpush2.bf16.msra.mxu0 0
        %643 = vmatprep.subr.bf16.mxu0 0
        %644 = vmatpush2.bf16.msra.mxu0 0
        %645 = vmatprep.subr.bf16.mxu0 0
        %646 = vmatpush2.bf16.msra.mxu0 0
        %647 = vmatprep.subr.bf16.mxu0 0
        %648 = vmatpush2.bf16.msra.mxu0 0
        %649 = vmatprep.subr.bf16.mxu0 0
        %650 = vmatpush2.bf16.msra.mxu0 0
        %651 = vmatprep.subr.bf16.mxu0 0
        %652 = vmatpush2.bf16.msra.mxu0 0
        %653 = vmatprep.subr.bf16.mxu0 0
        %654 = vmatpush2.bf16.msra.mxu0 0
        %655 = vmatprep.subr.bf16.mxu0 0
        %656 = vmatpush2.bf16.msra.mxu0 0
        %657 = vmatprep.mubr.bf16.mxu0 0
        %658 = vmatmul.mubr.bf16.gmra.mxu0 %v623
        %v659 = vpop.f32.mrf.mxu0
        %v660 = vadd.f32 0.0, %v659
        %v661 = vpop.f32.mrf.mxu0
        %v662 = vpop.f32.mrf.mxu0
        %v663 = vpop.f32.mrf.mxu0
        %664 = vdwg.mxu0
        %v666 = vrot.slane %v660, 4
        %667 = vrot.lane.b32.xlu0 %v666, 112
        %v668 = vpop.permute.xlu0 %667
        %v670 = vsub.f32 %v660, %v668
        %671 = vrot.lane.b32.xlu0 %v666, 16
        %v672 = vpop.permute.xlu0 %671
        %v674 = vadd.f32 %v660, %v672
        %v675 = vmul.f32 %v670, %v670
        %v676 = vmul.f32 %v674, %v674
        %678 = vrot.lane.b32.xlu0 %v676, 112
        %v679 = vpop.permute.xlu0 %678
        %v681 = vadd.f32 %v675, %v679
        %v682 = vrsqrt.pop %v681
        %v683 = vmul.f32 %v681, %v682
        %vm684 = vcmp.eq.f32.partialorder %v681, inf
        %v685 = vsel %vm684, %v681, %v683
        %vm686 = vcmp.eq.f32.partialorder %v681, 0.0
        %v687 = vand.u32 %v681, 2147483648
        %v688 = vsel %vm686, %v687, %v685
        %v689 = vsel %vm279, %v681, 0.0
        %690 = vadd.xlane.f32.xlu0 %v689
        %v691 = vpop.xlane.xlu0 %690
        %v692 = vmul.f32 %v691, %v283
        %v693 = vsel %vm279, %v688, 0.0
        %694 = vadd.xlane.f32.xlu0 %v693
        %v695 = vpop.xlane.xlu0 %694
        %v696 = vmul.f32 %v695, %v283
        %v697 = vmul.f32 %v696, %v696
        %v698 = vsub.f32 %v692, %v697
        %v699 = vmax.f32 %v698, 0.0
        %v700 = vrsqrt.pop %v699
        %v701 = vmul.f32 %v699, %v700
        %vm702 = vcmp.eq.f32.partialorder %v699, inf
        %v703 = vsel %vm702, %v699, %v701
        %vm704 = vcmp.eq.f32.partialorder %v699, 0.0
        %v705 = vand.u32 %v699, 2147483648
        %v706 = vsel %vm704, %v705, %v703
        %708 = vrot.lane.b32.xlu0 %v437, 112
        %v709 = vpop.permute.xlu0 %708
        %711 = vrot.lane.b32.xlu0 %v386, 17
        %v712 = vpop.permute.xlu0 %711
        %715 = vrot.lane.b32.xlu0 %v473, 33
        %v716 = vpop.permute.xlu0 %715
        %v719 = vrot.slane %v585, 4
        %720 = vrot.lane.b32.xlu0 %v719, 53
        %v721 = vpop.permute.xlu0 %720
        %v723 = vsel %vm298, %v709, %v467
        %vm724 = vcmask 138240
        %v725 = vsel %vm724, %v723, %v712
        %vm726 = vcmask 269312
        %v727 = vsel %vm726, %v725, %v716
        %vm728 = vcmask 400384
        %v729 = vsel %vm728, %v727, %v487
        %vm730 = vcmask 408576
        %v731 = vsel %vm730, %v729, %v571
        %vm732 = vcmask 416768
        %v733 = vsel %vm732, %v731, %v574
        %vm734 = vcmask 424960
        %v735 = vsel %vm734, %v733, %v575
        %vm736 = vcmask 433152
        %v737 = vsel %vm736, %v735, %v721
        %vm738 = vcmask 506880
        %v739 = vsel %vm738, %v737, %v598
        %vm740 = vcmask 515072
        %v741 = vsel %vm740, %v739, %v706
        %v742 = vld [vmem:[%s5] sm:$0xff]
        %v743 = vld [vmem:[%s5 + $0x8] sm:$0xff]
        %v744 = vld [vmem:[%s5 + $0x10] sm:$0xff]
        %v745 = vld [vmem:[%s5 + $0x18] sm:$0xff]
        %v746 = vld [vmem:[%s5 + $0x20] sm:$0xff]
        %v747 = vld [vmem:[%s5 + $0x28] sm:$0xff]
        %v748 = vld [vmem:[%s5 + $0x30] sm:$0xff]
        %v749 = vld [vmem:[%s5 + $0x38] sm:$0xff]
        %s750 = scalar_lea.vmem %s5, 64
        %v751 = vld [vmem:[%s750] sm:$0xff]
        %v752 = vld [vmem:[%s750 + $0x8] sm:$0xff]
        %v753 = vld [vmem:[%s750 + $0x10] sm:$0xff]
        %v754 = vld [vmem:[%s750 + $0x18] sm:$0xff]
        %v755 = vld [vmem:[%s750 + $0x20] sm:$0xff]
        %v756 = vld [vmem:[%s750 + $0x28] sm:$0xff]
        %v757 = vld [vmem:[%s750 + $0x30] sm:$0xff]
        %v758 = vld [vmem:[%s750 + $0x38] sm:$0xff]
        %v760 = vrot.slane %v741, 1
        %vm761 = vcmask 523264
        %v762 = vsel %vm761, %v760, 0
        %764 = vmatprep.subr.mxu0 0.0
        %765 = vmatpush1.msra.mxu0 0.0
        %766 = vmatprep.subr.mxu0 0.0
        %767 = vmatpush1.msra.mxu0 0.0
        %768 = vmatprep.subr.mxu0 0.0
        %769 = vmatpush1.msra.mxu0 0.0
        %770 = vmatprep.subr.mxu0 0.0
        %771 = vmatpush1.msra.mxu0 0.0
        %772 = vmatprep.subr.mxu0 0.0
        %773 = vmatpush1.msra.mxu0 0.0
        %774 = vmatprep.subr.mxu0 0.0
        %775 = vmatpush1.msra.mxu0 0.0
        %776 = vmatprep.subr.mxu0 0.0
        %777 = vmatpush1.msra.mxu0 0.0
        %778 = vmatprep.subr.mxu0 0.0
        %779 = vmatpush1.msra.mxu0 0.0
        %780 = vmatprep.subr.mxu0 0.0
        %781 = vmatpush1.msra.mxu0 %v758
        %782 = vmatprep.subr.mxu0 0.0
        %783 = vmatpush1.msra.mxu0 %v757
        %784 = vmatprep.subr.mxu0 0.0
        %785 = vmatpush1.msra.mxu0 %v756
        %786 = vmatprep.subr.mxu0 0.0
        %787 = vmatpush1.msra.mxu0 %v755
        %788 = vmatprep.subr.mxu0 0.0
        %789 = vmatpush1.msra.mxu0 %v754
        %790 = vmatprep.subr.mxu0 0.0
        %791 = vmatpush1.msra.mxu0 %v753
        %792 = vmatprep.subr.mxu0 0.0
        %793 = vmatpush1.msra.mxu0 %v752
        %794 = vmatprep.subr.mxu0 0.0
        %795 = vmatpush1.msra.mxu0 %v751
        %796 = vmatprep.subr.mxu0 0.0
        %797 = vmatpush2.msra.mxu0 0.0
        %798 = vmatprep.subr.mxu0 0.0
        %799 = vmatpush2.msra.mxu0 0.0
        %800 = vmatprep.subr.mxu0 0.0
        %801 = vmatpush2.msra.mxu0 0.0
        %802 = vmatprep.subr.mxu0 0.0
        %803 = vmatpush2.msra.mxu0 0.0
        %804 = vmatprep.subr.mxu0 0.0
        %805 = vmatpush2.msra.mxu0 0.0
        %806 = vmatprep.subr.mxu0 0.0
        %807 = vmatpush2.msra.mxu0 0.0
        %808 = vmatprep.subr.mxu0 0.0
        %809 = vmatpush2.msra.mxu0 0.0
        %810 = vmatprep.subr.mxu0 0.0
        %811 = vmatpush2.msra.mxu0 0.0
        %812 = vmatprep.subr.mxu0 0.0
        %813 = vmatpush2.msra.mxu0 0.0
        %814 = vmatprep.subr.mxu0 0.0
        %815 = vmatpush2.msra.mxu0 0.0
        %816 = vmatprep.subr.mxu0 0.0
        %817 = vmatpush2.msra.mxu0 0.0
        %818 = vmatprep.subr.mxu0 0.0
        %819 = vmatpush2.msra.mxu0 0.0
        %820 = vmatprep.subr.mxu0 0.0
        %821 = vmatpush2.msra.mxu0 0.0
        %822 = vmatprep.subr.mxu0 0.0
        %823 = vmatpush2.msra.mxu0 0.0
        %824 = vmatprep.subr.mxu0 0.0
        %825 = vmatpush2.msra.mxu0 0.0
        %826 = vmatprep.subr.mxu0 0.0
        %827 = vmatpush2.msra.mxu0 0.0
        %828 = vmatprep.mubr.f32.mxu0 0.0
        %829 = vmatmul.mubr.f32.gmra.mxu0 %v762
        %v830 = vpop.f32.mrf.mxu0
        %v831 = vadd.f32 0.0, %v830
        %v832 = vpop.f32.mrf.mxu0
        %833 = vdwg.mxu0
        %v834 = vsel %vm761, %v741, 0
        %836 = vmatprep.subr.mxu0 0.0
        %837 = vmatpush1.msra.mxu0 0.0
        %838 = vmatprep.subr.mxu0 0.0
        %839 = vmatpush1.msra.mxu0 0.0
        %840 = vmatprep.subr.mxu0 0.0
        %841 = vmatpush1.msra.mxu0 0.0
        %842 = vmatprep.subr.mxu0 0.0
        %843 = vmatpush1.msra.mxu0 0.0
        %844 = vmatprep.subr.mxu0 0.0
        %845 = vmatpush1.msra.mxu0 0.0
        %846 = vmatprep.subr.mxu0 0.0
        %847 = vmatpush1.msra.mxu0 0.0
        %848 = vmatprep.subr.mxu0 0.0
        %849 = vmatpush1.msra.mxu0 0.0
        %850 = vmatprep.subr.mxu0 0.0
        %851 = vmatpush1.msra.mxu0 0.0
        %852 = vmatprep.subr.mxu0 0.0
        %853 = vmatpush1.msra.mxu0 %v749
        %854 = vmatprep.subr.mxu0 0.0
        %855 = vmatpush1.msra.mxu0 %v748
        %856 = vmatprep.subr.mxu0 0.0
        %857 = vmatpush1.msra.mxu0 %v747
        %858 = vmatprep.subr.mxu0 0.0
        %859 = vmatpush1.msra.mxu0 %v746
        %860 = vmatprep.subr.mxu0 0.0
        %861 = vmatpush1.msra.mxu0 %v745
        %862 = vmatprep.subr.mxu0 0.0
        %863 = vmatpush1.msra.mxu0 %v744
        %864 = vmatprep.subr.mxu0 0.0
        %865 = vmatpush1.msra.mxu0 %v743
        %866 = vmatprep.subr.mxu0 0.0
        %867 = vmatpush1.msra.mxu0 %v742
        %868 = vmatprep.subr.mxu0 0.0
        %869 = vmatpush2.msra.mxu0 0.0
        %870 = vmatprep.subr.mxu0 0.0
        %871 = vmatpush2.msra.mxu0 0.0
        %872 = vmatprep.subr.mxu0 0.0
        %873 = vmatpush2.msra.mxu0 0.0
        %874 = vmatprep.subr.mxu0 0.0
        %875 = vmatpush2.msra.mxu0 0.0
        %876 = vmatprep.subr.mxu0 0.0
        %877 = vmatpush2.msra.mxu0 0.0
        %878 = vmatprep.subr.mxu0 0.0
        %879 = vmatpush2.msra.mxu0 0.0
        %880 = vmatprep.subr.mxu0 0.0
        %881 = vmatpush2.msra.mxu0 0.0
        %882 = vmatprep.subr.mxu0 0.0
        %883 = vmatpush2.msra.mxu0 0.0
        %884 = vmatprep.subr.mxu0 0.0
        %885 = vmatpush2.msra.mxu0 0.0
        %886 = vmatprep.subr.mxu0 0.0
        %887 = vmatpush2.msra.mxu0 0.0
        %888 = vmatprep.subr.mxu0 0.0
        %889 = vmatpush2.msra.mxu0 0.0
        %890 = vmatprep.subr.mxu0 0.0
        %891 = vmatpush2.msra.mxu0 0.0
        %892 = vmatprep.subr.mxu0 0.0
        %893 = vmatpush2.msra.mxu0 0.0
        %894 = vmatprep.subr.mxu0 0.0
        %895 = vmatpush2.msra.mxu0 0.0
        %896 = vmatprep.subr.mxu0 0.0
        %897 = vmatpush2.msra.mxu0 0.0
        %898 = vmatprep.subr.mxu0 0.0
        %899 = vmatpush2.msra.mxu0 0.0
        %900 = vmatprep.mubr.f32.mxu0 0.0
        %901 = vmatmul.mubr.f32.gmra.mxu0 %v834
        %v902 = vpop.f32.mrf.mxu0
        %v903 = vadd.f32 %v831, %v902
        %v904 = vpop.f32.mrf.mxu0
        %905 = vdwg.mxu0
        %s906 = scalar_lea.vmem %s5, 128
        %v907 = vld [vmem:[%s906] sm:$0xff]
        %v908 = vld [vmem:[%s906 + $0x8] sm:$0xff]
        %v909 = vld [vmem:[%s906 + $0x10] sm:$0xff]
        %v910 = vld [vmem:[%s906 + $0x18] sm:$0xff]
        %v911 = vld [vmem:[%s906 + $0x20] sm:$0xff]
        %v912 = vld [vmem:[%s906 + $0x28] sm:$0xff]
        %v913 = vld [vmem:[%s906 + $0x30] sm:$0xff]
        %v914 = vld [vmem:[%s906 + $0x38] sm:$0xff]
        %v915 = vrot.slane %v741, 2
        %v916 = vsel %vm761, %v915, 0
        %918 = vmatprep.subr.mxu0 0.0
        %919 = vmatpush1.msra.mxu0 0.0
        %920 = vmatprep.subr.mxu0 0.0
        %921 = vmatpush1.msra.mxu0 0.0
        %922 = vmatprep.subr.mxu0 0.0
        %923 = vmatpush1.msra.mxu0 0.0
        %924 = vmatprep.subr.mxu0 0.0
        %925 = vmatpush1.msra.mxu0 0.0
        %926 = vmatprep.subr.mxu0 0.0
        %927 = vmatpush1.msra.mxu0 0.0
        %928 = vmatprep.subr.mxu0 0.0
        %929 = vmatpush1.msra.mxu0 0.0
        %930 = vmatprep.subr.mxu0 0.0
        %931 = vmatpush1.msra.mxu0 0.0
        %932 = vmatprep.subr.mxu0 0.0
        %933 = vmatpush1.msra.mxu0 0.0
        %934 = vmatprep.subr.mxu0 0.0
        %935 = vmatpush1.msra.mxu0 %v914
        %936 = vmatprep.subr.mxu0 0.0
        %937 = vmatpush1.msra.mxu0 %v913
        %938 = vmatprep.subr.mxu0 0.0
        %939 = vmatpush1.msra.mxu0 %v912
        %940 = vmatprep.subr.mxu0 0.0
        %941 = vmatpush1.msra.mxu0 %v911
        %942 = vmatprep.subr.mxu0 0.0
        %943 = vmatpush1.msra.mxu0 %v910
        %944 = vmatprep.subr.mxu0 0.0
        %945 = vmatpush1.msra.mxu0 %v909
        %946 = vmatprep.subr.mxu0 0.0
        %947 = vmatpush1.msra.mxu0 %v908
        %948 = vmatprep.subr.mxu0 0.0
        %949 = vmatpush1.msra.mxu0 %v907
        %950 = vmatprep.subr.mxu0 0.0
        %951 = vmatpush2.msra.mxu0 0.0
        %952 = vmatprep.subr.mxu0 0.0
        %953 = vmatpush2.msra.mxu0 0.0
        %954 = vmatprep.subr.mxu0 0.0
        %955 = vmatpush2.msra.mxu0 0.0
        %956 = vmatprep.subr.mxu0 0.0
        %957 = vmatpush2.msra.mxu0 0.0
        %958 = vmatprep.subr.mxu0 0.0
        %959 = vmatpush2.msra.mxu0 0.0
        %960 = vmatprep.subr.mxu0 0.0
        %961 = vmatpush2.msra.mxu0 0.0
        %962 = vmatprep.subr.mxu0 0.0
        %963 = vmatpush2.msra.mxu0 0.0
        %964 = vmatprep.subr.mxu0 0.0
        %965 = vmatpush2.msra.mxu0 0.0
        %966 = vmatprep.subr.mxu0 0.0
        %967 = vmatpush2.msra.mxu0 0.0
        %968 = vmatprep.subr.mxu0 0.0
        %969 = vmatpush2.msra.mxu0 0.0
        %970 = vmatprep.subr.mxu0 0.0
        %971 = vmatpush2.msra.mxu0 0.0
        %972 = vmatprep.subr.mxu0 0.0
        %973 = vmatpush2.msra.mxu0 0.0
        %974 = vmatprep.subr.mxu0 0.0
        %975 = vmatpush2.msra.mxu0 0.0
        %976 = vmatprep.subr.mxu0 0.0
        %977 = vmatpush2.msra.mxu0 0.0
        %978 = vmatprep.subr.mxu0 0.0
        %979 = vmatpush2.msra.mxu0 0.0
        %980 = vmatprep.subr.mxu0 0.0
        %981 = vmatpush2.msra.mxu0 0.0
        %982 = vmatprep.mubr.f32.mxu0 0.0
        %983 = vmatmul.mubr.f32.gmra.mxu0 %v916
        %v984 = vpop.f32.mrf.mxu0
        %v985 = vadd.f32 0.0, %v984
        %v986 = vpop.f32.mrf.mxu0
        %987 = vdwg.mxu0
        %v988 = vadd.f32 %v903, %v985
        %s989 = scalar_lea.vmem %s5, 192
        %v990 = vld [vmem:[%s989] sm:$0xff]
        %v991 = vld [vmem:[%s989 + $0x8] sm:$0xff]
        %v992 = vld [vmem:[%s989 + $0x10] sm:$0xff]
        %v993 = vld [vmem:[%s989 + $0x18] sm:$0xff]
        %v994 = vld [vmem:[%s989 + $0x20] sm:$0xff]
        %v995 = vld [vmem:[%s989 + $0x28] sm:$0xff]
        %v996 = vld [vmem:[%s989 + $0x30] sm:$0xff]
        %v997 = vld [vmem:[%s989 + $0x38] sm:$0xff]
        %v998 = vrot.slane %v741, 3
        %v999 = vsel %vm761, %v998, 0
        %1001 = vmatprep.subr.mxu0 0.0
        %1002 = vmatpush1.msra.mxu0 0.0
        %1003 = vmatprep.subr.mxu0 0.0
        %1004 = vmatpush1.msra.mxu0 0.0
        %1005 = vmatprep.subr.mxu0 0.0
        %1006 = vmatpush1.msra.mxu0 0.0
        %1007 = vmatprep.subr.mxu0 0.0
        %1008 = vmatpush1.msra.mxu0 0.0
        %1009 = vmatprep.subr.mxu0 0.0
        %1010 = vmatpush1.msra.mxu0 0.0
        %1011 = vmatprep.subr.mxu0 0.0
        %1012 = vmatpush1.msra.mxu0 0.0
        %1013 = vmatprep.subr.mxu0 0.0
        %1014 = vmatpush1.msra.mxu0 0.0
        %1015 = vmatprep.subr.mxu0 0.0
        %1016 = vmatpush1.msra.mxu0 0.0
        %1017 = vmatprep.subr.mxu0 0.0
        %1018 = vmatpush1.msra.mxu0 %v997
        %1019 = vmatprep.subr.mxu0 0.0
        %1020 = vmatpush1.msra.mxu0 %v996
        %1021 = vmatprep.subr.mxu0 0.0
        %1022 = vmatpush1.msra.mxu0 %v995
        %1023 = vmatprep.subr.mxu0 0.0
        %1024 = vmatpush1.msra.mxu0 %v994
        %1025 = vmatprep.subr.mxu0 0.0
        %1026 = vmatpush1.msra.mxu0 %v993
        %1027 = vmatprep.subr.mxu0 0.0
        %1028 = vmatpush1.msra.mxu0 %v992
        %1029 = vmatprep.subr.mxu0 0.0
        %1030 = vmatpush1.msra.mxu0 %v991
        %1031 = vmatprep.subr.mxu0 0.0
        %1032 = vmatpush1.msra.mxu0 %v990
        %1033 = vmatprep.subr.mxu0 0.0
        %1034 = vmatpush2.msra.mxu0 0.0
        %1035 = vmatprep.subr.mxu0 0.0
        %1036 = vmatpush2.msra.mxu0 0.0
        %1037 = vmatprep.subr.mxu0 0.0
        %1038 = vmatpush2.msra.mxu0 0.0
        %1039 = vmatprep.subr.mxu0 0.0
        %1040 = vmatpush2.msra.mxu0 0.0
        %1041 = vmatprep.subr.mxu0 0.0
        %1042 = vmatpush2.msra.mxu0 0.0
        %1043 = vmatprep.subr.mxu0 0.0
        %1044 = vmatpush2.msra.mxu0 0.0
        %1045 = vmatprep.subr.mxu0 0.0
        %1046 = vmatpush2.msra.mxu0 0.0
        %1047 = vmatprep.subr.mxu0 0.0
        %1048 = vmatpush2.msra.mxu0 0.0
        %1049 = vmatprep.subr.mxu0 0.0
        %1050 = vmatpush2.msra.mxu0 0.0
        %1051 = vmatprep.subr.mxu0 0.0
        %1052 = vmatpush2.msra.mxu0 0.0
        %1053 = vmatprep.subr.mxu0 0.0
        %1054 = vmatpush2.msra.mxu0 0.0
        %1055 = vmatprep.subr.mxu0 0.0
        %1056 = vmatpush2.msra.mxu0 0.0
        %1057 = vmatprep.subr.mxu0 0.0
        %1058 = vmatpush2.msra.mxu0 0.0
        %1059 = vmatprep.subr.mxu0 0.0
        %1060 = vmatpush2.msra.mxu0 0.0
        %1061 = vmatprep.subr.mxu0 0.0
        %1062 = vmatpush2.msra.mxu0 0.0
        %1063 = vmatprep.subr.mxu0 0.0
        %1064 = vmatpush2.msra.mxu0 0.0
        %1065 = vmatprep.mubr.f32.mxu0 0.0
        %1066 = vmatmul.mubr.f32.gmra.mxu0 %v999
        %v1067 = vpop.f32.mrf.mxu0
        %v1068 = vadd.f32 0.0, %v1067
        %v1069 = vpop.f32.mrf.mxu0
        %1070 = vdwg.mxu0
        %v1071 = vadd.f32 %v988, %v1068
        %v1072 = vld [vmem:[%s6] sm:$0x1]
        %v1073 = vadd.f32 %v1071, %v1072
        %vm1074 = vcmask 16384
        %1075 = vst.msk [vmem:[%s268] sm:$0x1] %vm1074, %v1073
        %s1076 = sand.u32 %s181, 1
        %s1077 = scalar_lea.sflag [#allocation3], %s1076
        %s1078 = sand.u32 %s181, 1
        %s1079 = scalar_lea.vmem [#allocation2], %s1078
        // Predicated region
        $region49: #{tpu_custom_call.1} parent=47 // pred_check
          %p1080 = pneg %p191
        $region50: #{tpu_custom_call.1} parent=47 // pred_check_branch
          %1082 = sbr.rel (%p1080) target = $region52
        $region51: #{tpu_custom_call.1} parent=47 // pred_region
          %s1084 = ssub.s32 16, 16
          %1085 = vsyncadd %s1077, %s1084
          %s1086 = smul.addr %s21, 16
          %s1087 = scalar_lea.hbm %s7, %s1086
          %s1089 = sshll.u32 %s1079, 4
          %s1090 = int_to_ptr.vmem [resolvable:$true] %s1089
          %1092 = dma.vmem_to_hbm [thread:$0]  %s1090, 16, %s1087, %s1077
        $region52: #{tpu_custom_call.1} parent=47 // pred_fallthru
          _
      $region48: #{tpu_custom_call.1} parent=5 // pred_fallthru
        _
      %p1093 = scmp.le.s32.totalorder 2, %s16
      // Predicated region
      $region53: #{tpu_custom_call.1} parent=5 // pred_check
        %p1094 = pneg %p1093
      $region54: #{tpu_custom_call.1} parent=5 // pred_check_branch
        %1096 = sbr.rel (%p1094) target = $region56
      $region55: #{tpu_custom_call.1} parent=5 // pred_region
        %s1097 = ssub.s32 %s16, 2
        // Predicated region
        $region57: #{tpu_custom_call.1} parent=55 // pred_check
          %p1098 = pneg %p197
        $region58: #{tpu_custom_call.1} parent=55 // pred_check_branch
          %1100 = sbr.rel (%p1098) target = $region60
        $region59: #{tpu_custom_call.1} parent=55 // pred_region
          %s1101 = sand.u32 %s182, 1
          %s1102 = scalar_lea.sflag [#allocation3], %s1101
          %s1103 = sand.u32 %s182, 1
          %s1104 = scalar_lea.vmem [#allocation2], %s1103
          %1105 = dma.done %s1102, 16
        $region60: #{tpu_custom_call.1} parent=55 // pred_fallthru
          _
      $region56: #{tpu_custom_call.1} parent=5 // pred_fallthru
        _
    $region6: #{tpu_custom_call.1} parent=1 // loop_footer
      %s20 = sadd.s32 1, %s16
    $region7: #{tpu_custom_call.1} parent=1 // loop_footer_branch
      %15 = sbr.rel target = $region3
    $region8: #{tpu_custom_call.1} parent=1 // loop_exit
      _
    %1106 = vsyncpa [#allocation3], 1
    %s1107 = scalar_lea.sflag [#allocation3], 1
    %1108 = vsyncpa %s1107, 1

</llo_original>
